<compile_context>
chip_gen: v7x
topology: tpu7x:2x2x1
jax: 0.10.0
libtpu: 0.0.40
codegen_flags: <defaults>
</compile_context>

<pallas_src>
import functools
import math

import jax
import jax.numpy as jnp
from jax.experimental import pallas as pl
from jax.experimental.pallas import tpu as pltpu


def _silu(x):
    return x * jax.nn.sigmoid(x)


def _gsconv_kernel(xb_ref, xt_ref, xbt_ref, w1_ref, b1_ref, w2_ref, b2_ref, mask_ref,
                   out_ref, x1w_ref, *,
                   W, TH, HB, C_, ALPHA, shuffle_in_kernel, single_tile):
    t = pl.program_id(1)
    nt = pl.num_programs(1)
    TW = TH * W
    f32 = jnp.float32

    w1 = w1_ref[...]                 # (C_, C1) bf16, BN scale already folded in
    b1 = b1_ref[...]                 # (C_, 1)  f32

    # ---- cv1: 1x1 conv == channel matmul (bf16 MXU, f32 accumulate) on the tile rows ----
    x1_body = _silu(jnp.dot(w1, xb_ref[...], preferred_element_type=f32) + b1)   # (C_, TH*W)

    # ---- assemble the depthwise input window (rows -2 .. TH+2, flat & lane-dense) ----
    # scratch lanes: [dead pad][2 zero][2 halo rows][TH body rows][2 halo rows][2 zero]
    # the body starts at lane ALPHA (a multiple of 128) -> aligned body store + centre tap.
    x1w_ref[:, ALPHA - 2 * W - 2: ALPHA - 2 * W] = jnp.zeros((C_, 2), f32)
    x1w_ref[:, ALPHA + TW + 2 * W: ALPHA + TW + 2 * W + 2] = jnp.zeros((C_, 2), f32)
    x1w_ref[:, ALPHA: ALPHA + TW] = x1_body

    if single_tile:
        # whole image in one tile: both row halos are the conv's zero padding
        x1w_ref[:, ALPHA - 2 * W: ALPHA] = jnp.zeros((C_, 2 * W), f32)
        x1w_ref[:, ALPHA + TW: ALPHA + TW + 2 * W] = jnp.zeros((C_, 2 * W), f32)
    else:
        # recompute cv1 on the 2 rows just above / below this tile (halo recompute)
        top2 = xt_ref[:, (HB - 2) * W: HB * W]        # last 2 rows of the block above
        bot2 = xbt_ref[:, 0: 2 * W]                   # first 2 rows of the block below
        x1w_ref[:, ALPHA - 2 * W: ALPHA] = _silu(
            jnp.dot(w1, top2, preferred_element_type=f32) + b1)
        x1w_ref[:, ALPHA + TW: ALPHA + TW + 2 * W] = _silu(
            jnp.dot(w1, bot2, preferred_element_type=f32) + b1)

        @pl.when(t == 0)
        def _():                                      # image top edge -> zero padding
            x1w_ref[:, ALPHA - 2 * W: ALPHA] = jnp.zeros((C_, 2 * W), f32)

        @pl.when(t == nt - 1)
        def _():                                      # image bottom edge -> zero padding
            x1w_ref[:, ALPHA + TW: ALPHA + TW + 2 * W] = jnp.zeros((C_, 2 * W), f32)

    # ---- cv2: 5x5 depthwise conv (VPU) + folded-BN bias + SiLU, all lane-dense ----
    w2 = w2_ref[...]                 # (C_, 25) f32, BN scale folded, tap index = kh*5 + kw
    b2 = b2_ref[...]                 # (C_, 1)
    mask = mask_ref[...]             # (4, TH*W) width-padding masks for kw in (0, 1, 3, 4)

    def col_sum(kw):
        # sum over kh of tap(kh, kw) * row/col-shifted window (flat lane slices)
        base = ALPHA + (kw - 2)
        acc = w2[:, kw: kw + 1] * x1w_ref[:, base - 2 * W: base - 2 * W + TW]
        for kh in range(1, 5):
            off = base + (kh - 2) * W
            acc = acc + w2[:, kh * 5 + kw: kh * 5 + kw + 1] * x1w_ref[:, off: off + TW]
        return acc

    acc = col_sum(2)                                  # centre column: never masked
    for mi, kw in enumerate((0, 1, 3, 4)):            # off-centre columns: mask width padding
        acc = acc + mask[mi: mi + 1, :] * col_sum(kw)

    x2 = _silu(acc + b2)                              # (C_, TH*W)

    # ---- store; for even c_ the GSConv channel shuffle is emitted here as 4 slabs ----
    odt = out_ref.dtype
    if shuffle_in_kernel:
        ch = C_ // 2
        out_ref[0:ch, :] = x1_body[0:ch].astype(odt)            # x1 even channels
        out_ref[ch:C_, :] = x2[0:ch].astype(odt)                # dw even channels
        out_ref[C_:C_ + ch, :] = x1_body[ch:C_].astype(odt)     # x1 odd channels
        out_ref[C_ + ch:2 * C_, :] = x2[ch:C_].astype(odt)      # dw odd channels
    else:
        out_ref[0:C_, :] = x1_body.astype(odt)
        out_ref[C_:2 * C_, :] = x2.astype(odt)


def _fold_bn(gamma, beta, mean, var, eps=1e-5):
    s = gamma / jnp.sqrt(var + eps)
    return s, beta - mean * s


def gsconv(x, params, *, max_tile_rows=None, vmem_budget_bytes=8 * 1024 * 1024):
    """GSConv forward.  x: (B, C1, H, W) float32 NCHW.  Returns (B, 2*c_, H, W)."""
    B, C1, H, W = x.shape
    (w1, g1, beta1, m1, v1, w2, g2, beta2, m2, v2) = params
    C_ = w1.shape[0]
    K = w2.shape[-1]
    assert K == 5, "GSConv.cv2 is a 5x5 depthwise conv"

    # fold inference-mode BatchNorm scales into the conv weights (only +bias stays in-kernel)
    s1, b1 = _fold_bn(g1, beta1, m1, v1)
    s2, b2 = _fold_bn(g2, beta2, m2, v2)

    # For even c_, realise the channel shuffle in-kernel by pre-permuting the channel
    # order (even channels of x1/dw first) and writing 4 contiguous output slabs.
    shuffle_in_kernel = (C_ % 2 == 0)
    if shuffle_in_kernel:
        perm = list(range(0, C_, 2)) + list(range(1, C_, 2))
    else:
        perm = list(range(C_))

    pidx = jnp.asarray(perm, dtype=jnp.int32)
    w1f = (w1 * s1[:, None])[pidx].astype(jnp.bfloat16)                 # bf16 MXU path
    b1v = b1[pidx].reshape(C_, 1).astype(jnp.float32)
    w2f = (w2 * s2[:, None, None])[pidx].reshape(C_, K * K).astype(jnp.float32)
    b2v = b2[pidx].reshape(C_, 1).astype(jnp.float32)

    # ---- spatial (row) tiling: grid = (B, H/TH), each tile recomputes cv1 on a 2-row halo ----
    R0 = 128 // math.gcd(W, 128)                  # min rows whose flat width is lane-aligned
    HALO = ((4 + R0 - 1) // R0) * R0              # halo-fetch granularity (>= 4 rows)
    cands = [th for th in range(HALO, H + 1, HALO) if H % th == 0]
    # per-row VMEM working set: x blocks (bf16, double buffered) + out blocks (f32, double
    # buffered) + window scratch + a few live f32 intermediates
    bytes_per_row = W * (2 * 2 * C1 + 2 * 4 * 2 * C_ + 6 * 4 * C_)
    cap = max(HALO, vmem_budget_bytes // max(bytes_per_row, 1))
    if max_tile_rows is not None:
        cap = min(cap, max_tile_rows)
    tiled = [th for th in cands if th <= cap]
    if tiled:
        TH = max(tiled); nt = H // TH; single_tile = (nt == 1); HB = HALO
    elif cands:
        TH = min(cands); nt = H // TH; single_tile = (nt == 1); HB = HALO
    else:                                          # H not tileable on a lane-aligned row grid
        TH, nt, single_tile = H, 1, True
        HB = R0 if R0 <= H else H

    TW = TH * W
    ALPHA = ((2 * W + 2 + 127) // 128) * 128       # lane-aligned start of the window body

    # width-padding masks for the off-centre kw taps (kw = 0, 1, 3, 4)
    s_idx = jnp.arange(TW, dtype=jnp.int32) % W
    col_mask = jnp.stack([s_idx >= 2, s_idx >= 1,
                          s_idx <= W - 2, s_idx <= W - 3]).astype(jnp.float32)

    x_flat = x.reshape(B, C1, H * W).astype(jnp.bfloat16)

    if single_tile:
        top_map = lambda b, t: (b, 0, 0)                       # halo blocks unused
        bot_map = lambda b, t: (b, 0, 0)
    else:
        r = TH // HALO
        nhb = H // HALO
        top_map = lambda b, t: (b, 0, jnp.maximum(t * r - 1, 0))          # rows just above
        bot_map = lambda b, t: (b, 0, jnp.minimum((t + 1) * r, nhb - 1))  # rows just below

    kernel = functools.partial(
        _gsconv_kernel, W=W, TH=TH, HB=HB, C_=C_, ALPHA=ALPHA,
        shuffle_in_kernel=shuffle_in_kernel, single_tile=single_tile)

    out = pl.pallas_call(
        kernel,
        out_shape=jax.ShapeDtypeStruct((B, 2 * C_, H * W), x.dtype),
        grid_spec=pltpu.PrefetchScalarGridSpec(
            num_scalar_prefetch=0,
            grid=(B, nt),
            in_specs=[
                pl.BlockSpec((None, C1, TW), lambda b, t: (b, 0, t)),      # x rows of this tile
                pl.BlockSpec((None, C1, HB * W), top_map),                 # x rows above (halo)
                pl.BlockSpec((None, C1, HB * W), bot_map),                 # x rows below (halo)
                pl.BlockSpec((C_, C1), lambda b, t: (0, 0)),               # cv1 weight (folded)
                pl.BlockSpec((C_, 1), lambda b, t: (0, 0)),                # cv1 BN bias
                pl.BlockSpec((C_, K * K), lambda b, t: (0, 0)),            # cv2 taps (folded)
                pl.BlockSpec((C_, 1), lambda b, t: (0, 0)),                # cv2 BN bias
                pl.BlockSpec((4, TW), lambda b, t: (0, 0)),                # width-pad masks
            ],
            out_specs=pl.BlockSpec((None, 2 * C_, TW), lambda b, t: (b, 0, t)),
            scratch_shapes=[pltpu.VMEM((C_, ALPHA + TW + 2 * W + 2), jnp.float32)],
        ),
        compiler_params=pltpu.CompilerParams(
            dimension_semantics=("parallel", "parallel"),
            vmem_limit_bytes=32 * 1024 * 1024),
    )(x_flat, x_flat, x_flat, w1f, b1v, w2f, b2v, col_mask)

    out = out.reshape(B, 2 * C_, H, W)               # free row-major reshape
    if not shuffle_in_kernel:
        # TODO(synk): odd c_ -> wrapper-side gather for the GSConv channel shuffle.
        n = 2 * C_
        perm_out = jnp.asarray(list(range(0, n, 2)) + list(range(1, n, 2)), dtype=jnp.int32)
        out = out[:, perm_out, :, :]
    return out


def _gsconv_ref(x, params):
    """Pure-JAX reference mirroring the PyTorch forward (inference-mode BN).

    The 1x1-conv operands are rounded to bf16 to mirror the kernel's MXU input
    precision policy; all other math is f32.
    """
    (w1, g1, beta1, m1, v1, w2, g2, beta2, m2, v2) = params
    C_ = w1.shape[0]
    eps = 1e-5
    s1 = g1 / jnp.sqrt(v1 + eps); b1 = beta1 - m1 * s1
    s2 = g2 / jnp.sqrt(v2 + eps); b2 = beta2 - m2 * s2
    silu = lambda t: t * jax.nn.sigmoid(t)

    w1f = (w1 * s1[:, None]).astype(jnp.bfloat16).astype(jnp.float32)
    xr = x.astype(jnp.bfloat16).astype(jnp.float32)
    y = jnp.einsum('bchw,oc->bohw', xr, w1f)
    x1 = silu(y + b1[None, :, None, None])

    B, C, H, W = x1.shape
    xp = jnp.pad(x1, ((0, 0), (0, 0), (2, 2), (2, 2)))
    acc = jnp.zeros_like(x1)
    for kh in range(5):
        for kw in range(5):
            acc = acc + w2[None, :, kh, kw, None, None] * xp[:, :, kh:kh + H, kw:kw + W]
    x2b = silu(acc * s2[None, :, None, None] + b2[None, :, None, None])

    x2 = jnp.concatenate([x1, x2b], axis=1)
    n = 2 * C_
    y2 = x2.reshape(B * n // 2, 2, H * W).transpose(1, 0, 2).reshape(2, -1, n // 2, H, W)
    return jnp.concatenate([y2[0], y2[1]], axis=1)


if __name__ == "__main__":
    key = jax.random.PRNGKey(0)
    B, C1, C2, H, W = 2, 4, 8, 16, 16
    C_ = C2 // 2

    ks = jax.random.split(key, 11)
    x = jax.random.normal(ks[0], (B, C1, H, W), jnp.float32)
    w1 = jax.random.normal(ks[1], (C_, C1), jnp.float32) * 0.5      # cv1 conv (c_, c1, 1, 1)
    g1 = jax.random.uniform(ks[2], (C_,), jnp.float32, 0.5, 1.5)    # cv1 BN gamma
    beta1 = jax.random.normal(ks[3], (C_,), jnp.float32) * 0.1      # cv1 BN beta
    m1 = jax.random.normal(ks[4], (C_,), jnp.float32) * 0.1         # cv1 BN running_mean
    v1 = jax.random.uniform(ks[5], (C_,), jnp.float32, 0.5, 1.5)    # cv1 BN running_var
    w2 = jax.random.normal(ks[6], (C_, 5, 5), jnp.float32) * 0.2    # cv2 depthwise (c_, 1, 5, 5)
    g2 = jax.random.uniform(ks[7], (C_,), jnp.float32, 0.5, 1.5)
    beta2 = jax.random.normal(ks[8], (C_,), jnp.float32) * 0.1
    m2 = jax.random.normal(ks[9], (C_,), jnp.float32) * 0.1
    v2 = jax.random.uniform(ks[10], (C_,), jnp.float32, 0.5, 1.5)
    params = (w1, g1, beta1, m1, v1, w2, g2, beta2, m2, v2)

    ref = jax.block_until_ready(_gsconv_ref(x, params))

    # tiled path: max_tile_rows=8 forces a (B, 2) grid with a 2-row halo per tile
    out_tiled = jax.block_until_ready(gsconv(x, params, max_tile_rows=8))
    # default path: whole image in a single tile per batch element
    out_full = jax.block_until_ready(gsconv(x, params))

    assert out_tiled.shape == (B, C2, H, W), out_tiled.shape
    assert out_full.shape == (B, C2, H, W), out_full.shape
    for out in (out_tiled, out_full):
        err = float(jnp.max(jnp.abs(out - ref)))
        assert jnp.allclose(out, ref, rtol=1e-2, atol=1e-2), err
    print("KERNEL_OK")
</pallas_src>

<mosaic_0001>
module attributes {stable_mosaic.version = 11 : i64} {
  func.func @_gsconv_kernel(%arg0: i32, %arg1: i32, %arg2: memref<1x4x128xbf16, #tpu.memory_space<vmem>>, %arg3: memref<1x4x128xbf16, #tpu.memory_space<vmem>>, %arg4: memref<1x4x128xbf16, #tpu.memory_space<vmem>>, %arg5: memref<4x4xbf16, #tpu.memory_space<vmem>>, %arg6: memref<4x1xf32, #tpu.memory_space<vmem>>, %arg7: memref<4x25xf32, #tpu.memory_space<vmem>>, %arg8: memref<4x1xf32, #tpu.memory_space<vmem>>, %arg9: memref<4x128xf32, #tpu.memory_space<vmem>>, %arg10: memref<1x8x128xf32, #tpu.memory_space<vmem>>, %arg11: memref<4x290xf32, #tpu.memory_space<vmem>>) attributes {dimension_semantics = [#tpu.dimension_semantics<parallel>, #tpu.dimension_semantics<parallel>], iteration_bounds = array<i64: 2, 2>, scalar_prefetch = 0 : i64, scratch_operands = 1 : i64, tpu.core_type = #tpu.core_type<tc>, window_params = [{transform_indices = @transform_0, window_bounds = array<i64: 1, 4, 128>}, {transform_indices = @transform_1, window_bounds = array<i64: 1, 4, 128>}, {transform_indices = @transform_2, window_bounds = array<i64: 1, 4, 128>}, {pipeline_mode = #tpu.pipeline_mode<synchronous>, transform_indices = @transform_3, window_bounds = array<i64: 4, 4>}, {pipeline_mode = #tpu.pipeline_mode<synchronous>, transform_indices = @transform_4, window_bounds = array<i64: 4, 1>}, {pipeline_mode = #tpu.pipeline_mode<synchronous>, transform_indices = @transform_5, window_bounds = array<i64: 4, 25>}, {pipeline_mode = #tpu.pipeline_mode<synchronous>, transform_indices = @transform_6, window_bounds = array<i64: 4, 1>}, {pipeline_mode = #tpu.pipeline_mode<synchronous>, transform_indices = @transform_7, window_bounds = array<i64: 4, 128>}, {transform_indices = @transform_8, window_bounds = array<i64: 1, 8, 128>}]} {
    %c0 = arith.constant 0 : index
    %c0_0 = arith.constant 0 : index
    %0 = vector.load %arg5[%c0, %c0_0] : memref<4x4xbf16, #tpu.memory_space<vmem>>, vector<4x4xbf16>
    %c0_1 = arith.constant 0 : index
    %c0_2 = arith.constant 0 : index
    %1 = vector.load %arg6[%c0_1, %c0_2] : memref<4x1xf32, #tpu.memory_space<vmem>>, vector<4x1xf32>
    %c0_3 = arith.constant 0 : index
    %c0_4 = arith.constant 0 : index
    %c0_5 = arith.constant 0 : index
    %2 = vector.load %arg2[%c0_3, %c0_4, %c0_5] : memref<1x4x128xbf16, #tpu.memory_space<vmem>>, vector<1x4x128xbf16>
    %3 = vector.shape_cast %2 : vector<1x4x128xbf16> to vector<4x128xbf16>
    %cst = arith.constant dense<0.000000e+00> : vector<4x128xf32>
    %4 = tpu.matmul %0, %3, %cst {dimension_numbers = #tpu.dot_dimension_numbers<[1], [0], [0], [1], [0, 0, 1, 1], [], []>} : vector<4x4xbf16>, vector<4x128xbf16>, vector<4x128xf32> -> vector<4x128xf32>
    %5 = vector.broadcast %1 : vector<4x1xf32> to vector<4x128xf32>
    %6 = arith.addf %4, %5 : vector<4x128xf32>
    %7 = arith.negf %6 : vector<4x128xf32>
    %8 = math.exp %7 : vector<4x128xf32>
    %cst_6 = arith.constant 1.000000e+00 : f32
    %9 = vector.broadcast %cst_6 : f32 to vector<4x128xf32>
    %10 = arith.addf %9, %8 : vector<4x128xf32>
    %11 = arith.divf %9, %10 : vector<4x128xf32>
    %12 = arith.mulf %6, %11 : vector<4x128xf32>
    %cst_7 = arith.constant 0.000000e+00 : f32
    %13 = vector.broadcast %cst_7 : f32 to vector<4x2xf32>
    %c0_8 = arith.constant 0 : index
    %c94 = arith.constant 94 : index
    %14 = vector.load %arg11[%c0_8, %c94] : memref<4x290xf32, #tpu.memory_space<vmem>>, vector<4x2xf32>
    tpu.vector_store %arg11[%c0_8, %c94], %13 {strides = array<i32>} : memref<4x290xf32, #tpu.memory_space<vmem>>, vector<4x2xf32>,
    %cst_9 = arith.constant 0.000000e+00 : f32
    %15 = vector.broadcast %cst_9 : f32 to vector<4x2xf32>
    %c0_10 = arith.constant 0 : index
    %c288 = arith.constant 288 : index
    %16 = vector.load %arg11[%c0_10, %c288] : memref<4x290xf32, #tpu.memory_space<vmem>>, vector<4x2xf32>
    tpu.vector_store %arg11[%c0_10, %c288], %15 {strides = array<i32>} : memref<4x290xf32, #tpu.memory_space<vmem>>, vector<4x2xf32>,
    %c0_11 = arith.constant 0 : index
    %c128 = arith.constant 128 : index
    %17 = vector.load %arg11[%c0_11, %c128] : memref<4x290xf32, #tpu.memory_space<vmem>>, vector<4x128xf32>
    tpu.vector_store %arg11[%c0_11, %c128], %12 {strides = array<i32>} : memref<4x290xf32, #tpu.memory_space<vmem>>, vector<4x128xf32>,
    %c0_12 = arith.constant 0 : index
    %c0_13 = arith.constant 0 : index
    %c96 = arith.constant 96 : index
    %18 = vector.load %arg3[%c0_12, %c0_13, %c96] : memref<1x4x128xbf16, #tpu.memory_space<vmem>>, vector<1x4x32xbf16>
    %19 = vector.shape_cast %18 : vector<1x4x32xbf16> to vector<4x32xbf16>
    %c0_14 = arith.constant 0 : index
    %c0_15 = arith.constant 0 : index
    %c0_16 = arith.constant 0 : index
    %20 = vector.load %arg4[%c0_14, %c0_15, %c0_16] : memref<1x4x128xbf16, #tpu.memory_space<vmem>>, vector<1x4x32xbf16>
    %21 = vector.shape_cast %20 : vector<1x4x32xbf16> to vector<4x32xbf16>
    %cst_17 = arith.constant dense<0.000000e+00> : vector<4x32xf32>
    %22 = tpu.matmul %0, %19, %cst_17 {dimension_numbers = #tpu.dot_dimension_numbers<[1], [0], [0], [1], [0, 0, 1, 1], [], []>} : vector<4x4xbf16>, vector<4x32xbf16>, vector<4x32xf32> -> vector<4x32xf32>
    %23 = vector.broadcast %1 : vector<4x1xf32> to vector<4x32xf32>
    %24 = arith.addf %22, %23 : vector<4x32xf32>
    %25 = arith.negf %24 : vector<4x32xf32>
    %26 = math.exp %25 : vector<4x32xf32>
    %cst_18 = arith.constant 1.000000e+00 : f32
    %27 = vector.broadcast %cst_18 : f32 to vector<4x32xf32>
    %28 = arith.addf %27, %26 : vector<4x32xf32>
    %29 = arith.divf %27, %28 : vector<4x32xf32>
    %30 = arith.mulf %24, %29 : vector<4x32xf32>
    %c0_19 = arith.constant 0 : index
    %c96_20 = arith.constant 96 : index
    %31 = vector.load %arg11[%c0_19, %c96_20] : memref<4x290xf32, #tpu.memory_space<vmem>>, vector<4x32xf32>
    tpu.vector_store %arg11[%c0_19, %c96_20], %30 {strides = array<i32>} : memref<4x290xf32, #tpu.memory_space<vmem>>, vector<4x32xf32>,
    %cst_21 = arith.constant dense<0.000000e+00> : vector<4x32xf32>
    %32 = tpu.matmul %0, %21, %cst_21 {dimension_numbers = #tpu.dot_dimension_numbers<[1], [0], [0], [1], [0, 0, 1, 1], [], []>} : vector<4x4xbf16>, vector<4x32xbf16>, vector<4x32xf32> -> vector<4x32xf32>
    %33 = vector.broadcast %1 : vector<4x1xf32> to vector<4x32xf32>
    %34 = arith.addf %32, %33 : vector<4x32xf32>
    %35 = arith.negf %34 : vector<4x32xf32>
    %36 = math.exp %35 : vector<4x32xf32>
    %cst_22 = arith.constant 1.000000e+00 : f32
    %37 = vector.broadcast %cst_22 : f32 to vector<4x32xf32>
    %38 = arith.addf %37, %36 : vector<4x32xf32>
    %39 = arith.divf %37, %38 : vector<4x32xf32>
    %40 = arith.mulf %34, %39 : vector<4x32xf32>
    %c0_23 = arith.constant 0 : index
    %c256 = arith.constant 256 : index
    %41 = vector.load %arg11[%c0_23, %c256] : memref<4x290xf32, #tpu.memory_space<vmem>>, vector<4x32xf32>
    tpu.vector_store %arg11[%c0_23, %c256], %40 {strides = array<i32>} : memref<4x290xf32, #tpu.memory_space<vmem>>, vector<4x32xf32>,
    %c0_i32 = arith.constant 0 : i32
    %42 = arith.cmpi eq, %arg1, %c0_i32 : i32
    %43 = arith.extui %42 : i1 to i32
    %c0_i32_24 = arith.constant 0 : i32
    %44 = arith.cmpi ne, %43, %c0_i32_24 : i32
    scf.if %44 {
      %cst_70 = arith.constant 0.000000e+00 : f32
      %211 = vector.broadcast %cst_70 : f32 to vector<4x32xf32>
      %c0_71 = arith.constant 0 : index
      %c96_72 = arith.constant 96 : index
      %212 = vector.load %arg11[%c0_71, %c96_72] : memref<4x290xf32, #tpu.memory_space<vmem>>, vector<4x32xf32>
      tpu.vector_store %arg11[%c0_71, %c96_72], %211 {strides = array<i32>} : memref<4x290xf32, #tpu.memory_space<vmem>>, vector<4x32xf32>,
    } else {
    }
    %c1_i32 = arith.constant 1 : i32
    %45 = arith.cmpi eq, %arg1, %c1_i32 : i32
    %46 = arith.extui %45 : i1 to i32
    %c0_i32_25 = arith.constant 0 : i32
    %47 = arith.cmpi ne, %46, %c0_i32_25 : i32
    scf.if %47 {
      %cst_70 = arith.constant 0.000000e+00 : f32
      %211 = vector.broadcast %cst_70 : f32 to vector<4x32xf32>
      %c0_71 = arith.constant 0 : index
      %c256_72 = arith.constant 256 : index
      %212 = vector.load %arg11[%c0_71, %c256_72] : memref<4x290xf32, #tpu.memory_space<vmem>>, vector<4x32xf32>
      tpu.vector_store %arg11[%c0_71, %c256_72], %211 {strides = array<i32>} : memref<4x290xf32, #tpu.memory_space<vmem>>, vector<4x32xf32>,
    } else {
    }
    %c0_26 = arith.constant 0 : index
    %c0_27 = arith.constant 0 : index
    %48 = vector.load %arg7[%c0_26, %c0_27] : memref<4x25xf32, #tpu.memory_space<vmem>>, vector<4x25xf32>
    %c0_28 = arith.constant 0 : index
    %c0_29 = arith.constant 0 : index
    %49 = vector.load %arg8[%c0_28, %c0_29] : memref<4x1xf32, #tpu.memory_space<vmem>>, vector<4x1xf32>
    %c0_30 = arith.constant 0 : index
    %c0_31 = arith.constant 0 : index
    %50 = vector.load %arg9[%c0_30, %c0_31] : memref<4x128xf32, #tpu.memory_space<vmem>>, vector<4x128xf32>
    %51 = vector.extract_strided_slice %48 {offsets = [0, 2], sizes = [4, 1], strides = [1, 1]} : vector<4x25xf32> to vector<4x1xf32>
    %c0_32 = arith.constant 0 : index
    %c96_33 = arith.constant 96 : index
    %52 = vector.load %arg11[%c0_32, %c96_33] : memref<4x290xf32, #tpu.memory_space<vmem>>, vector<4x128xf32>
    %53 = vector.broadcast %51 : vector<4x1xf32> to vector<4x128xf32>
    %54 = arith.mulf %53, %52 : vector<4x128xf32>
    %55 = vector.extract_strided_slice %48 {offsets = [0, 7], sizes = [4, 1], strides = [1, 1]} : vector<4x25xf32> to vector<4x1xf32>
    %c0_34 = arith.constant 0 : index
    %c112 = arith.constant 112 : index
    %56 = vector.load %arg11[%c0_34, %c112] : memref<4x290xf32, #tpu.memory_space<vmem>>, vector<4x128xf32>
    %57 = vector.broadcast %55 : vector<4x1xf32> to vector<4x128xf32>
    %58 = arith.mulf %57, %56 : vector<4x128xf32>
    %59 = arith.addf %54, %58 : vector<4x128xf32>
    %60 = vector.extract_strided_slice %48 {offsets = [0, 12], sizes = [4, 1], strides = [1, 1]} : vector<4x25xf32> to vector<4x1xf32>
    %c0_35 = arith.constant 0 : index
    %c128_36 = arith.constant 128 : index
    %61 = vector.load %arg11[%c0_35, %c128_36] : memref<4x290xf32, #tpu.memory_space<vmem>>, vector<4x128xf32>
    %62 = vector.broadcast %60 : vector<4x1xf32> to vector<4x128xf32>
    %63 = arith.mulf %62, %61 : vector<4x128xf32>
    %64 = arith.addf %59, %63 : vector<4x128xf32>
    %65 = vector.extract_strided_slice %48 {offsets = [0, 17], sizes = [4, 1], strides = [1, 1]} : vector<4x25xf32> to vector<4x1xf32>
    %c0_37 = arith.constant 0 : index
    %c144 = arith.constant 144 : index
    %66 = vector.load %arg11[%c0_37, %c144] : memref<4x290xf32, #tpu.memory_space<vmem>>, vector<4x128xf32>
    %67 = vector.broadcast %65 : vector<4x1xf32> to vector<4x128xf32>
    %68 = arith.mulf %67, %66 : vector<4x128xf32>
    %69 = arith.addf %64, %68 : vector<4x128xf32>
    %70 = vector.extract_strided_slice %48 {offsets = [0, 22], sizes = [4, 1], strides = [1, 1]} : vector<4x25xf32> to vector<4x1xf32>
    %c0_38 = arith.constant 0 : index
    %c160 = arith.constant 160 : index
    %71 = vector.load %arg11[%c0_38, %c160] : memref<4x290xf32, #tpu.memory_space<vmem>>, vector<4x128xf32>
    %72 = vector.broadcast %70 : vector<4x1xf32> to vector<4x128xf32>
    %73 = arith.mulf %72, %71 : vector<4x128xf32>
    %74 = arith.addf %69, %73 : vector<4x128xf32>
    %75 = vector.extract_strided_slice %50 {offsets = [0, 0], sizes = [1, 128], strides = [1, 1]} : vector<4x128xf32> to vector<1x128xf32>
    %76 = vector.extract_strided_slice %48 {offsets = [0, 0], sizes = [4, 1], strides = [1, 1]} : vector<4x25xf32> to vector<4x1xf32>
    %c0_39 = arith.constant 0 : index
    %c94_40 = arith.constant 94 : index
    %77 = vector.load %arg11[%c0_39, %c94_40] : memref<4x290xf32, #tpu.memory_space<vmem>>, vector<4x128xf32>
    %78 = vector.broadcast %76 : vector<4x1xf32> to vector<4x128xf32>
    %79 = arith.mulf %78, %77 : vector<4x128xf32>
    %80 = vector.extract_strided_slice %48 {offsets = [0, 5], sizes = [4, 1], strides = [1, 1]} : vector<4x25xf32> to vector<4x1xf32>
    %c0_41 = arith.constant 0 : index
    %c110 = arith.constant 110 : index
    %81 = vector.load %arg11[%c0_41, %c110] : memref<4x290xf32, #tpu.memory_space<vmem>>, vector<4x128xf32>
    %82 = vector.broadcast %80 : vector<4x1xf32> to vector<4x128xf32>
    %83 = arith.mulf %82, %81 : vector<4x128xf32>
    %84 = arith.addf %79, %83 : vector<4x128xf32>
    %85 = vector.extract_strided_slice %48 {offsets = [0, 10], sizes = [4, 1], strides = [1, 1]} : vector<4x25xf32> to vector<4x1xf32>
    %c0_42 = arith.constant 0 : index
    %c126 = arith.constant 126 : index
    %86 = vector.load %arg11[%c0_42, %c126] : memref<4x290xf32, #tpu.memory_space<vmem>>, vector<4x128xf32>
    %87 = vector.broadcast %85 : vector<4x1xf32> to vector<4x128xf32>
    %88 = arith.mulf %87, %86 : vector<4x128xf32>
    %89 = arith.addf %84, %88 : vector<4x128xf32>
    %90 = vector.extract_strided_slice %48 {offsets = [0, 15], sizes = [4, 1], strides = [1, 1]} : vector<4x25xf32> to vector<4x1xf32>
    %c0_43 = arith.constant 0 : index
    %c142 = arith.constant 142 : index
    %91 = vector.load %arg11[%c0_43, %c142] : memref<4x290xf32, #tpu.memory_space<vmem>>, vector<4x128xf32>
    %92 = vector.broadcast %90 : vector<4x1xf32> to vector<4x128xf32>
    %93 = arith.mulf %92, %91 : vector<4x128xf32>
    %94 = arith.addf %89, %93 : vector<4x128xf32>
    %95 = vector.extract_strided_slice %48 {offsets = [0, 20], sizes = [4, 1], strides = [1, 1]} : vector<4x25xf32> to vector<4x1xf32>
    %c0_44 = arith.constant 0 : index
    %c158 = arith.constant 158 : index
    %96 = vector.load %arg11[%c0_44, %c158] : memref<4x290xf32, #tpu.memory_space<vmem>>, vector<4x128xf32>
    %97 = vector.broadcast %95 : vector<4x1xf32> to vector<4x128xf32>
    %98 = arith.mulf %97, %96 : vector<4x128xf32>
    %99 = arith.addf %94, %98 : vector<4x128xf32>
    %100 = vector.broadcast %75 : vector<1x128xf32> to vector<4x128xf32>
    %101 = arith.mulf %100, %99 : vector<4x128xf32>
    %102 = arith.addf %74, %101 : vector<4x128xf32>
    %103 = vector.extract_strided_slice %50 {offsets = [1, 0], sizes = [1, 128], strides = [1, 1]} : vector<4x128xf32> to vector<1x128xf32>
    %104 = vector.extract_strided_slice %48 {offsets = [0, 1], sizes = [4, 1], strides = [1, 1]} : vector<4x25xf32> to vector<4x1xf32>
    %c0_45 = arith.constant 0 : index
    %c95 = arith.constant 95 : index
    %105 = vector.load %arg11[%c0_45, %c95] : memref<4x290xf32, #tpu.memory_space<vmem>>, vector<4x128xf32>
    %106 = vector.broadcast %104 : vector<4x1xf32> to vector<4x128xf32>
    %107 = arith.mulf %106, %105 : vector<4x128xf32>
    %108 = vector.extract_strided_slice %48 {offsets = [0, 6], sizes = [4, 1], strides = [1, 1]} : vector<4x25xf32> to vector<4x1xf32>
    %c0_46 = arith.constant 0 : index
    %c111 = arith.constant 111 : index
    %109 = vector.load %arg11[%c0_46, %c111] : memref<4x290xf32, #tpu.memory_space<vmem>>, vector<4x128xf32>
    %110 = vector.broadcast %108 : vector<4x1xf32> to vector<4x128xf32>
    %111 = arith.mulf %110, %109 : vector<4x128xf32>
    %112 = arith.addf %107, %111 : vector<4x128xf32>
    %113 = vector.extract_strided_slice %48 {offsets = [0, 11], sizes = [4, 1], strides = [1, 1]} : vector<4x25xf32> to vector<4x1xf32>
    %c0_47 = arith.constant 0 : index
    %c127 = arith.constant 127 : index
    %114 = vector.load %arg11[%c0_47, %c127] : memref<4x290xf32, #tpu.memory_space<vmem>>, vector<4x128xf32>
    %115 = vector.broadcast %113 : vector<4x1xf32> to vector<4x128xf32>
    %116 = arith.mulf %115, %114 : vector<4x128xf32>
    %117 = arith.addf %112, %116 : vector<4x128xf32>
    %118 = vector.extract_strided_slice %48 {offsets = [0, 16], sizes = [4, 1], strides = [1, 1]} : vector<4x25xf32> to vector<4x1xf32>
    %c0_48 = arith.constant 0 : index
    %c143 = arith.constant 143 : index
    %119 = vector.load %arg11[%c0_48, %c143] : memref<4x290xf32, #tpu.memory_space<vmem>>, vector<4x128xf32>
    %120 = vector.broadcast %118 : vector<4x1xf32> to vector<4x128xf32>
    %121 = arith.mulf %120, %119 : vector<4x128xf32>
    %122 = arith.addf %117, %121 : vector<4x128xf32>
    %123 = vector.extract_strided_slice %48 {offsets = [0, 21], sizes = [4, 1], strides = [1, 1]} : vector<4x25xf32> to vector<4x1xf32>
    %c0_49 = arith.constant 0 : index
    %c159 = arith.constant 159 : index
    %124 = vector.load %arg11[%c0_49, %c159] : memref<4x290xf32, #tpu.memory_space<vmem>>, vector<4x128xf32>
    %125 = vector.broadcast %123 : vector<4x1xf32> to vector<4x128xf32>
    %126 = arith.mulf %125, %124 : vector<4x128xf32>
    %127 = arith.addf %122, %126 : vector<4x128xf32>
    %128 = vector.broadcast %103 : vector<1x128xf32> to vector<4x128xf32>
    %129 = arith.mulf %128, %127 : vector<4x128xf32>
    %130 = arith.addf %102, %129 : vector<4x128xf32>
    %131 = vector.extract_strided_slice %50 {offsets = [2, 0], sizes = [1, 128], strides = [1, 1]} : vector<4x128xf32> to vector<1x128xf32>
    %132 = vector.extract_strided_slice %48 {offsets = [0, 3], sizes = [4, 1], strides = [1, 1]} : vector<4x25xf32> to vector<4x1xf32>
    %c0_50 = arith.constant 0 : index
    %c97 = arith.constant 97 : index
    %133 = vector.load %arg11[%c0_50, %c97] : memref<4x290xf32, #tpu.memory_space<vmem>>, vector<4x128xf32>
    %134 = vector.broadcast %132 : vector<4x1xf32> to vector<4x128xf32>
    %135 = arith.mulf %134, %133 : vector<4x128xf32>
    %136 = vector.extract_strided_slice %48 {offsets = [0, 8], sizes = [4, 1], strides = [1, 1]} : vector<4x25xf32> to vector<4x1xf32>
    %c0_51 = arith.constant 0 : index
    %c113 = arith.constant 113 : index
    %137 = vector.load %arg11[%c0_51, %c113] : memref<4x290xf32, #tpu.memory_space<vmem>>, vector<4x128xf32>
    %138 = vector.broadcast %136 : vector<4x1xf32> to vector<4x128xf32>
    %139 = arith.mulf %138, %137 : vector<4x128xf32>
    %140 = arith.addf %135, %139 : vector<4x128xf32>
    %141 = vector.extract_strided_slice %48 {offsets = [0, 13], sizes = [4, 1], strides = [1, 1]} : vector<4x25xf32> to vector<4x1xf32>
    %c0_52 = arith.constant 0 : index
    %c129 = arith.constant 129 : index
    %142 = vector.load %arg11[%c0_52, %c129] : memref<4x290xf32, #tpu.memory_space<vmem>>, vector<4x128xf32>
    %143 = vector.broadcast %141 : vector<4x1xf32> to vector<4x128xf32>
    %144 = arith.mulf %143, %142 : vector<4x128xf32>
    %145 = arith.addf %140, %144 : vector<4x128xf32>
    %146 = vector.extract_strided_slice %48 {offsets = [0, 18], sizes = [4, 1], strides = [1, 1]} : vector<4x25xf32> to vector<4x1xf32>
    %c0_53 = arith.constant 0 : index
    %c145 = arith.constant 145 : index
    %147 = vector.load %arg11[%c0_53, %c145] : memref<4x290xf32, #tpu.memory_space<vmem>>, vector<4x128xf32>
    %148 = vector.broadcast %146 : vector<4x1xf32> to vector<4x128xf32>
    %149 = arith.mulf %148, %147 : vector<4x128xf32>
    %150 = arith.addf %145, %149 : vector<4x128xf32>
    %151 = vector.extract_strided_slice %48 {offsets = [0, 23], sizes = [4, 1], strides = [1, 1]} : vector<4x25xf32> to vector<4x1xf32>
    %c0_54 = arith.constant 0 : index
    %c161 = arith.constant 161 : index
    %152 = vector.load %arg11[%c0_54, %c161] : memref<4x290xf32, #tpu.memory_space<vmem>>, vector<4x128xf32>
    %153 = vector.broadcast %151 : vector<4x1xf32> to vector<4x128xf32>
    %154 = arith.mulf %153, %152 : vector<4x128xf32>
    %155 = arith.addf %150, %154 : vector<4x128xf32>
    %156 = vector.broadcast %131 : vector<1x128xf32> to vector<4x128xf32>
    %157 = arith.mulf %156, %155 : vector<4x128xf32>
    %158 = arith.addf %130, %157 : vector<4x128xf32>
    %159 = vector.extract_strided_slice %50 {offsets = [3, 0], sizes = [1, 128], strides = [1, 1]} : vector<4x128xf32> to vector<1x128xf32>
    %160 = vector.extract_strided_slice %48 {offsets = [0, 4], sizes = [4, 1], strides = [1, 1]} : vector<4x25xf32> to vector<4x1xf32>
    %c0_55 = arith.constant 0 : index
    %c98 = arith.constant 98 : index
    %161 = vector.load %arg11[%c0_55, %c98] : memref<4x290xf32, #tpu.memory_space<vmem>>, vector<4x128xf32>
    %162 = vector.broadcast %160 : vector<4x1xf32> to vector<4x128xf32>
    %163 = arith.mulf %162, %161 : vector<4x128xf32>
    %164 = vector.extract_strided_slice %48 {offsets = [0, 9], sizes = [4, 1], strides = [1, 1]} : vector<4x25xf32> to vector<4x1xf32>
    %c0_56 = arith.constant 0 : index
    %c114 = arith.constant 114 : index
    %165 = vector.load %arg11[%c0_56, %c114] : memref<4x290xf32, #tpu.memory_space<vmem>>, vector<4x128xf32>
    %166 = vector.broadcast %164 : vector<4x1xf32> to vector<4x128xf32>
    %167 = arith.mulf %166, %165 : vector<4x128xf32>
    %168 = arith.addf %163, %167 : vector<4x128xf32>
    %169 = vector.extract_strided_slice %48 {offsets = [0, 14], sizes = [4, 1], strides = [1, 1]} : vector<4x25xf32> to vector<4x1xf32>
    %c0_57 = arith.constant 0 : index
    %c130 = arith.constant 130 : index
    %170 = vector.load %arg11[%c0_57, %c130] : memref<4x290xf32, #tpu.memory_space<vmem>>, vector<4x128xf32>
    %171 = vector.broadcast %169 : vector<4x1xf32> to vector<4x128xf32>
    %172 = arith.mulf %171, %170 : vector<4x128xf32>
    %173 = arith.addf %168, %172 : vector<4x128xf32>
    %174 = vector.extract_strided_slice %48 {offsets = [0, 19], sizes = [4, 1], strides = [1, 1]} : vector<4x25xf32> to vector<4x1xf32>
    %c0_58 = arith.constant 0 : index
    %c146 = arith.constant 146 : index
    %175 = vector.load %arg11[%c0_58, %c146] : memref<4x290xf32, #tpu.memory_space<vmem>>, vector<4x128xf32>
    %176 = vector.broadcast %174 : vector<4x1xf32> to vector<4x128xf32>
    %177 = arith.mulf %176, %175 : vector<4x128xf32>
    %178 = arith.addf %173, %177 : vector<4x128xf32>
    %179 = vector.extract_strided_slice %48 {offsets = [0, 24], sizes = [4, 1], strides = [1, 1]} : vector<4x25xf32> to vector<4x1xf32>
    %c0_59 = arith.constant 0 : index
    %c162 = arith.constant 162 : index
    %180 = vector.load %arg11[%c0_59, %c162] : memref<4x290xf32, #tpu.memory_space<vmem>>, vector<4x128xf32>
    %181 = vector.broadcast %179 : vector<4x1xf32> to vector<4x128xf32>
    %182 = arith.mulf %181, %180 : vector<4x128xf32>
    %183 = arith.addf %178, %182 : vector<4x128xf32>
    %184 = vector.broadcast %159 : vector<1x128xf32> to vector<4x128xf32>
    %185 = arith.mulf %184, %183 : vector<4x128xf32>
    %186 = arith.addf %158, %185 : vector<4x128xf32>
    %187 = vector.broadcast %49 : vector<4x1xf32> to vector<4x128xf32>
    %188 = arith.addf %186, %187 : vector<4x128xf32>
    %189 = arith.negf %188 : vector<4x128xf32>
    %190 = math.exp %189 : vector<4x128xf32>
    %cst_60 = arith.constant 1.000000e+00 : f32
    %191 = vector.broadcast %cst_60 : f32 to vector<4x128xf32>
    %192 = arith.addf %191, %190 : vector<4x128xf32>
    %193 = arith.divf %191, %192 : vector<4x128xf32>
    %194 = arith.mulf %188, %193 : vector<4x128xf32>
    %195 = vector.extract_strided_slice %12 {offsets = [0, 0], sizes = [2, 128], strides = [1, 1]} : vector<4x128xf32> to vector<2x128xf32>
    %c0_61 = arith.constant 0 : index
    %c0_62 = arith.constant 0 : index
    %c0_63 = arith.constant 0 : index
    %196 = vector.load %arg10[%c0_61, %c0_62, %c0_63] : memref<1x8x128xf32, #tpu.memory_space<vmem>>, vector<1x2x128xf32>
    %197 = vector.shape_cast %196 : vector<1x2x128xf32> to vector<2x128xf32>
    %198 = vector.shape_cast %195 : vector<2x128xf32> to vector<1x2x128xf32>
    tpu.vector_store %arg10[%c0_61, %c0_62, %c0_63], %198 {strides = array<i32>} : memref<1x8x128xf32, #tpu.memory_space<vmem>>, vector<1x2x128xf32>,
    %199 = vector.extract_strided_slice %194 {offsets = [0, 0], sizes = [2, 128], strides = [1, 1]} : vector<4x128xf32> to vector<2x128xf32>
    %c0_64 = arith.constant 0 : index
    %c2 = arith.constant 2 : index
    %c0_65 = arith.constant 0 : index
    %200 = vector.load %arg10[%c0_64, %c2, %c0_65] : memref<1x8x128xf32, #tpu.memory_space<vmem>>, vector<1x2x128xf32>
    %201 = vector.shape_cast %200 : vector<1x2x128xf32> to vector<2x128xf32>
    %202 = vector.shape_cast %199 : vector<2x128xf32> to vector<1x2x128xf32>
    tpu.vector_store %arg10[%c0_64, %c2, %c0_65], %202 {strides = array<i32>} : memref<1x8x128xf32, #tpu.memory_space<vmem>>, vector<1x2x128xf32>,
    %203 = vector.extract_strided_slice %12 {offsets = [2, 0], sizes = [2, 128], strides = [1, 1]} : vector<4x128xf32> to vector<2x128xf32>
    %c0_66 = arith.constant 0 : index
    %c4 = arith.constant 4 : index
    %c0_67 = arith.constant 0 : index
    %204 = vector.load %arg10[%c0_66, %c4, %c0_67] : memref<1x8x128xf32, #tpu.memory_space<vmem>>, vector<1x2x128xf32>
    %205 = vector.shape_cast %204 : vector<1x2x128xf32> to vector<2x128xf32>
    %206 = vector.shape_cast %203 : vector<2x128xf32> to vector<1x2x128xf32>
    tpu.vector_store %arg10[%c0_66, %c4, %c0_67], %206 {strides = array<i32>} : memref<1x8x128xf32, #tpu.memory_space<vmem>>, vector<1x2x128xf32>,
    %207 = vector.extract_strided_slice %194 {offsets = [2, 0], sizes = [2, 128], strides = [1, 1]} : vector<4x128xf32> to vector<2x128xf32>
    %c0_68 = arith.constant 0 : index
    %c6 = arith.constant 6 : index
    %c0_69 = arith.constant 0 : index
    %208 = vector.load %arg10[%c0_68, %c6, %c0_69] : memref<1x8x128xf32, #tpu.memory_space<vmem>>, vector<1x2x128xf32>
    %209 = vector.shape_cast %208 : vector<1x2x128xf32> to vector<2x128xf32>
    %210 = vector.shape_cast %207 : vector<2x128xf32> to vector<1x2x128xf32>
    tpu.vector_store %arg10[%c0_68, %c6, %c0_69], %210 {strides = array<i32>} : memref<1x8x128xf32, #tpu.memory_space<vmem>>, vector<1x2x128xf32>,
    return
  }
  func.func @transform_0(%arg0: i32, %arg1: i32) -> (i32, i32, i32) {
    %c0_i32 = arith.constant 0 : i32
    %c0_i32_0 = arith.constant 0 : i32
    return %arg0, %c0_i32, %arg1 : i32, i32, i32
  }
  func.func @transform_1(%arg0: i32, %arg1: i32) -> (i32, i32, i32) {
    %c1_i32 = arith.constant 1 : i32
    %0 = arith.muli %arg1, %c1_i32 : i32
    %c1_i32_0 = arith.constant 1 : i32
    %1 = arith.subi %0, %c1_i32_0 : i32
    %c0_i32 = arith.constant 0 : i32
    %2 = arith.maxsi %1, %c0_i32 : i32
    %c0_i32_1 = arith.constant 0 : i32
    %c0_i32_2 = arith.constant 0 : i32
    return %arg0, %c0_i32_1, %2 : i32, i32, i32
  }
  func.func @transform_2(%arg0: i32, %arg1: i32) -> (i32, i32, i32) {
    %c1_i32 = arith.constant 1 : i32
    %0 = arith.addi %arg1, %c1_i32 : i32
    %c1_i32_0 = arith.constant 1 : i32
    %1 = arith.muli %0, %c1_i32_0 : i32
    %c1_i32_1 = arith.constant 1 : i32
    %2 = arith.minsi %1, %c1_i32_1 : i32
    %c0_i32 = arith.constant 0 : i32
    %c0_i32_2 = arith.constant 0 : i32
    return %arg0, %c0_i32, %2 : i32, i32, i32
  }
  func.func @transform_3(%arg0: i32, %arg1: i32) -> (i32, i32) {
    %c0_i32 = arith.constant 0 : i32
    %c0_i32_0 = arith.constant 0 : i32
    %c0_i32_1 = arith.constant 0 : i32
    return %c0_i32, %c0_i32_0 : i32, i32
  }
  func.func @transform_4(%arg0: i32, %arg1: i32) -> (i32, i32) {
    %c0_i32 = arith.constant 0 : i32
    %c0_i32_0 = arith.constant 0 : i32
    %c0_i32_1 = arith.constant 0 : i32
    return %c0_i32, %c0_i32_0 : i32, i32
  }
  func.func @transform_5(%arg0: i32, %arg1: i32) -> (i32, i32) {
    %c0_i32 = arith.constant 0 : i32
    %c0_i32_0 = arith.constant 0 : i32
    %c0_i32_1 = arith.constant 0 : i32
    return %c0_i32, %c0_i32_0 : i32, i32
  }
  func.func @transform_6(%arg0: i32, %arg1: i32) -> (i32, i32) {
    %c0_i32 = arith.constant 0 : i32
    %c0_i32_0 = arith.constant 0 : i32
    %c0_i32_1 = arith.constant 0 : i32
    return %c0_i32, %c0_i32_0 : i32, i32
  }
  func.func @transform_7(%arg0: i32, %arg1: i32) -> (i32, i32) {
    %c0_i32 = arith.constant 0 : i32
    %c0_i32_0 = arith.constant 0 : i32
    %c0_i32_1 = arith.constant 0 : i32
    return %c0_i32, %c0_i32_0 : i32, i32
  }
  func.func @transform_8(%arg0: i32, %arg1: i32) -> (i32, i32, i32) {
    %c0_i32 = arith.constant 0 : i32
    %c0_i32_0 = arith.constant 0 : i32
    return %arg0, %c0_i32, %arg1 : i32, i32, i32
  }
}

</mosaic_0001>

<llo_original>
// kernel: tpu_custom_call.1
$region0: #{tpu_custom_call.1}
  #allocation0 [shape = 'u32[]', space=smem, size = 0x4, offset = 0x4, fixed_abs, tag = 'smem constant byte address 0x4 - core index']
  #allocation1 [shape = 'u32[144,128]{1,0:T(1,128)}', space=vmem, size = 0x12000, scoped, tag = 'internal scratch']
  #allocation2 [shape = 'f32[4,290]{1,0:T(4,128)}', space=vmem, size = 0x1800, scoped, tag = 'scratch operand']
  %s0 = inlined_call_operand.vmem [shape: bf16[2,4,256], index: 0, kind: input, shape index: {}]
  %s1 = inlined_call_operand.hbm [shape: bf16[2,4,256], index: 1, kind: input, shape index: {}]
  %s2 = inlined_call_operand.vmem [shape: bf16[2,4,256], index: 2, kind: input, shape index: {}]
  %s3 = inlined_call_operand.hbm [shape: bf16[4,4], index: 3, kind: input, shape index: {}]
  %s4 = inlined_call_operand.vmem [shape: f32[4,1], index: 4, kind: input, shape index: {}]
  %s5 = inlined_call_operand.vmem [shape: f32[4,25], index: 5, kind: input, shape index: {}]
  %s6 = inlined_call_operand.vmem [shape: f32[4,1], index: 6, kind: input, shape index: {}]
  %s7 = inlined_call_operand.vmem [shape: f32[4,128], index: 7, kind: input, shape index: {}]
  %s8 = inlined_call_operand.hbm [shape: f32[2,8,256], index: 8, kind: output, shape index: {}]
  %s9 = sld [smem:[#allocation0]]
  $region81: #{tpu_custom_call.1} parent=0
    _
  %s11 = ssub.s32 1, %s9
  %s12 = scalar_select 0, %s11, %s9
  $region1: #{tpu_custom_call.1} parent=0
    #allocation3 [shape = 'u8[2048]{0}', space=vmem, size = 0x800, scoped, tag = 'input window, operand 1']
    #allocation4 [shape = 's32[2]{0}', space=sflag, size = 0x8, scoped, tag = 'scoped memory for tpu_custom_call.1']
    #allocation5 [shape = 's32[2]{0}', space=sflag, size = 0x8, scoped, tag = 'scoped memory for tpu_custom_call.1']
    #allocation6 [shape = 'u8[1024]{0}', space=vmem, size = 0x400, scoped, tag = 'input window, operand 3, single buffered']
    #allocation7 [shape = 's32[1]{0}', space=sflag, size = 0x4, scoped, tag = 'scoped memory for tpu_custom_call.1']
    #allocation8 [shape = 'u8[8192]{0}', space=vmem, size = 0x2000, scoped, tag = 'output window, operand 0']
    %13 = vsyncpa [#allocation4], 0
    %s14 = scalar_lea.sflag [#allocation4], 1
    %15 = vsyncpa %s14, 0
    %16 = vsyncpa [#allocation7], 0
    %17 = vsyncpa [#allocation5], 0
    %s18 = scalar_lea.sflag [#allocation5], 1
    %19 = vsyncpa %s18, 0
    loop: start=0, step=1, limit=6
    $region2: #{tpu_custom_call.1} parent=1 // loop_pre_header
      _
    $region3: #{tpu_custom_call.1} parent=1 // loop_header
      %s21 = sphi 0, %s25
      %p22 = scmp.ge.s32.totalorder %s21, 6
      %s28 = sphi 0, %s40
      %s29 = sphi 0, %s36
      %s30 = sphi 0, %s28
      %s31 = sphi 0, %s29
      %s32 = sphi 0, %s30
      %s33 = sphi 0, %s31
      %s45 = sphi 0, %s47
      %s48 = sphi 0, %s45
      %s49 = sphi 0, %s48
      %s65 = sphi 0, %s49
      %s79 = sphi 0, %s81
      %s82 = sphi 0, %s79
      %s83 = sphi 0, %s82
      %s99 = sphi 0, %s83
      %s113 = sphi 0, %s115
      %s116 = sphi 0, %s113
      %s117 = sphi 0, %s116
      %s133 = sphi 0, %s117
      %s137 = sphi 0, %s137
      %s139 = sphi 0, %s137
      %s140 = sphi 0, %s139
      %s154 = sphi 0, %s140
      %s158 = sphi 0, %s158
      %s160 = sphi 0, %s158
      %s161 = sphi 0, %s160
      %s175 = sphi 0, %s161
      %s179 = sphi 0, %s179
      %s181 = sphi 0, %s179
      %s182 = sphi 0, %s181
      %s196 = sphi 0, %s182
      %s200 = sphi 0, %s200
      %s202 = sphi 0, %s200
      %s203 = sphi 0, %s202
      %s217 = sphi 0, %s203
      %s221 = sphi 0, %s221
      %s223 = sphi 0, %s221
      %s224 = sphi 0, %s223
      %s238 = sphi 0, %s224
      %s246 = sphi 0, %s248
      %s249 = sphi 0, %s246
      %s250 = sphi 0, %s249
      %s266 = sphi 0, %s250
    $region4: #{tpu_custom_call.1} parent=1 // loop_header_branch
      %24 = sbr.rel (%p22) target = $region8
    $region5: #{tpu_custom_call.1} parent=1 // loop_body
      %s26 = ssub.s32 %s21, 1
      %s27 = ssub.s32 %s21, 2
      %s34 = sadd.s32 1, %s29
      %p35 = scmp.ge.s32.totalorder %s34, 2
      %s36 = scalar_select %p35, 0, %s34
      %s37 = sadd.s32 1, %s28
      %s38 = scalar_select %p35, %s37, %s28
      %p39 = scmp.ge.s32.totalorder %s38, 2
      %s40 = scalar_select %p39, 0, %s38
      %s41 = ssub.s32 %s28, %s40
      %s42 = ssub.s32 %s29, %s36
      %s43 = sor.u32 %s41, %s42
      %p44 = scmp.eq.s32.totalorder %s43, 0
      %s46 = sadd.s32 %s45, 1
      %s47 = scalar_select %p44, %s45, %s46
      %p50 = pneg %p44
      %p51 = scmp.eq.s32.totalorder %s21, 3
      %p52 = por %p50, %p51
      %p53 = scmp.ne.s32.totalorder %s45, %s48
      %p54 = scmp.eq.s32.totalorder %s21, 0
      %p55 = por %p53, %p54
      %p56 = scmp.ne.s32.totalorder %s45, %s48
      %p57 = scmp.eq.s32.totalorder %s26, 3
      %p58 = por %p56, %p57
      %p59 = scmp.ne.s32.totalorder %s48, %s49
      %p60 = scmp.eq.s32.totalorder %s26, 0
      %p61 = por %p59, %p60
      %p62 = scmp.ne.s32.totalorder %s48, %s49
      %p63 = scmp.eq.s32.totalorder %s27, 3
      %p64 = por %p62, %p63
      %p66 = scmp.ne.s32.totalorder %s49, %s65
      %p67 = scmp.eq.s32.totalorder %s27, 0
      %p68 = por %p66, %p67
      %s69 = ssub.s32 %s29, 1
      %p70 = scmp.gt.s32.totalorder %s69, 0
      %s71 = scalar_select %p70, %s69, 0
      %s72 = ssub.s32 %s36, 1
      %p73 = scmp.gt.s32.totalorder %s72, 0
      %s74 = scalar_select %p73, %s72, 0
      %s75 = ssub.s32 %s28, %s40
      %s76 = ssub.s32 %s71, %s74
      %s77 = sor.u32 %s75, %s76
      %p78 = scmp.eq.s32.totalorder %s77, 0
      %s80 = sadd.s32 %s79, 1
      %s81 = scalar_select %p78, %s79, %s80
      %p84 = pneg %p78
      %p85 = scmp.eq.s32.totalorder %s21, 3
      %p86 = por %p84, %p85
      %p87 = scmp.ne.s32.totalorder %s79, %s82
      %p88 = scmp.eq.s32.totalorder %s21, 0
      %p89 = por %p87, %p88
      %p90 = scmp.ne.s32.totalorder %s79, %s82
      %p91 = scmp.eq.s32.totalorder %s26, 3
      %p92 = por %p90, %p91
      %p93 = scmp.ne.s32.totalorder %s82, %s83
      %p94 = scmp.eq.s32.totalorder %s26, 0
      %p95 = por %p93, %p94
      %p96 = scmp.ne.s32.totalorder %s82, %s83
      %p97 = scmp.eq.s32.totalorder %s27, 3
      %p98 = por %p96, %p97
      %p100 = scmp.ne.s32.totalorder %s83, %s99
      %p101 = scmp.eq.s32.totalorder %s27, 0
      %p102 = por %p100, %p101
      %s103 = sadd.s32 %s29, 1
      %p104 = scmp.lt.s32.totalorder %s103, 1
      %s105 = scalar_select %p104, %s103, 1
      %s106 = sadd.s32 %s36, 1
      %p107 = scmp.lt.s32.totalorder %s106, 1
      %s108 = scalar_select %p107, %s106, 1
      %s109 = ssub.s32 %s28, %s40
      %s110 = ssub.s32 %s105, %s108
      %s111 = sor.u32 %s109, %s110
      %p112 = scmp.eq.s32.totalorder %s111, 0
      %s114 = sadd.s32 %s113, 1
      %s115 = scalar_select %p112, %s113, %s114
      %p118 = pneg %p112
      %p119 = scmp.eq.s32.totalorder %s21, 3
      %p120 = por %p118, %p119
      %p121 = scmp.ne.s32.totalorder %s113, %s116
      %p122 = scmp.eq.s32.totalorder %s21, 0
      %p123 = por %p121, %p122
      %p124 = scmp.ne.s32.totalorder %s113, %s116
      %p125 = scmp.eq.s32.totalorder %s26, 3
      %p126 = por %p124, %p125
      %p127 = scmp.ne.s32.totalorder %s116, %s117
      %p128 = scmp.eq.s32.totalorder %s26, 0
      %p129 = por %p127, %p128
      %p130 = scmp.ne.s32.totalorder %s116, %s117
      %p131 = scmp.eq.s32.totalorder %s27, 3
      %p132 = por %p130, %p131
      %p134 = scmp.ne.s32.totalorder %s117, %s133
      %p135 = scmp.eq.s32.totalorder %s27, 0
      %p136 = por %p134, %p135
      %s138 = sadd.s32 %s137, 1
      %p141 = scmp.eq.s32.totalorder %s21, 3
      %p142 = scmp.ne.s32.totalorder %s137, %s139
      %p143 = scmp.eq.s32.totalorder %s21, 0
      %p144 = por %p142, %p143
      %p145 = scmp.ne.s32.totalorder %s137, %s139
      %p146 = scmp.eq.s32.totalorder %s26, 3
      %p147 = por %p145, %p146
      %p148 = scmp.ne.s32.totalorder %s139, %s140
      %p149 = scmp.eq.s32.totalorder %s26, 0
      %p150 = por %p148, %p149
      %p151 = scmp.ne.s32.totalorder %s139, %s140
      %p152 = scmp.eq.s32.totalorder %s27, 3
      %p153 = por %p151, %p152
      %p155 = scmp.ne.s32.totalorder %s140, %s154
      %p156 = scmp.eq.s32.totalorder %s27, 0
      %p157 = por %p155, %p156
      %s159 = sadd.s32 %s158, 1
      %p162 = scmp.eq.s32.totalorder %s21, 3
      %p163 = scmp.ne.s32.totalorder %s158, %s160
      %p164 = scmp.eq.s32.totalorder %s21, 0
      %p165 = por %p163, %p164
      %p166 = scmp.ne.s32.totalorder %s158, %s160
      %p167 = scmp.eq.s32.totalorder %s26, 3
      %p168 = por %p166, %p167
      %p169 = scmp.ne.s32.totalorder %s160, %s161
      %p170 = scmp.eq.s32.totalorder %s26, 0
      %p171 = por %p169, %p170
      %p172 = scmp.ne.s32.totalorder %s160, %s161
      %p173 = scmp.eq.s32.totalorder %s27, 3
      %p174 = por %p172, %p173
      %p176 = scmp.ne.s32.totalorder %s161, %s175
      %p177 = scmp.eq.s32.totalorder %s27, 0
      %p178 = por %p176, %p177
      %s180 = sadd.s32 %s179, 1
      %p183 = scmp.eq.s32.totalorder %s21, 3
      %p184 = scmp.ne.s32.totalorder %s179, %s181
      %p185 = scmp.eq.s32.totalorder %s21, 0
      %p186 = por %p184, %p185
      %p187 = scmp.ne.s32.totalorder %s179, %s181
      %p188 = scmp.eq.s32.totalorder %s26, 3
      %p189 = por %p187, %p188
      %p190 = scmp.ne.s32.totalorder %s181, %s182
      %p191 = scmp.eq.s32.totalorder %s26, 0
      %p192 = por %p190, %p191
      %p193 = scmp.ne.s32.totalorder %s181, %s182
      %p194 = scmp.eq.s32.totalorder %s27, 3
      %p195 = por %p193, %p194
      %p197 = scmp.ne.s32.totalorder %s182, %s196
      %p198 = scmp.eq.s32.totalorder %s27, 0
      %p199 = por %p197, %p198
      %s201 = sadd.s32 %s200, 1
      %p204 = scmp.eq.s32.totalorder %s21, 3
      %p205 = scmp.ne.s32.totalorder %s200, %s202
      %p206 = scmp.eq.s32.totalorder %s21, 0
      %p207 = por %p205, %p206
      %p208 = scmp.ne.s32.totalorder %s200, %s202
      %p209 = scmp.eq.s32.totalorder %s26, 3
      %p210 = por %p208, %p209
      %p211 = scmp.ne.s32.totalorder %s202, %s203
      %p212 = scmp.eq.s32.totalorder %s26, 0
      %p213 = por %p211, %p212
      %p214 = scmp.ne.s32.totalorder %s202, %s203
      %p215 = scmp.eq.s32.totalorder %s27, 3
      %p216 = por %p214, %p215
      %p218 = scmp.ne.s32.totalorder %s203, %s217
      %p219 = scmp.eq.s32.totalorder %s27, 0
      %p220 = por %p218, %p219
      %s222 = sadd.s32 %s221, 1
      %p225 = scmp.eq.s32.totalorder %s21, 3
      %p226 = scmp.ne.s32.totalorder %s221, %s223
      %p227 = scmp.eq.s32.totalorder %s21, 0
      %p228 = por %p226, %p227
      %p229 = scmp.ne.s32.totalorder %s221, %s223
      %p230 = scmp.eq.s32.totalorder %s26, 3
      %p231 = por %p229, %p230
      %p232 = scmp.ne.s32.totalorder %s223, %s224
      %p233 = scmp.eq.s32.totalorder %s26, 0
      %p234 = por %p232, %p233
      %p235 = scmp.ne.s32.totalorder %s223, %s224
      %p236 = scmp.eq.s32.totalorder %s27, 3
      %p237 = por %p235, %p236
      %p239 = scmp.ne.s32.totalorder %s224, %s238
      %p240 = scmp.eq.s32.totalorder %s27, 0
      %p241 = por %p239, %p240
      %s242 = ssub.s32 %s28, %s40
      %s243 = ssub.s32 %s29, %s36
      %s244 = sor.u32 %s242, %s243
      %p245 = scmp.eq.s32.totalorder %s244, 0
      %s247 = sadd.s32 %s246, 1
      %s248 = scalar_select %p245, %s246, %s247
      %p251 = pneg %p245
      %p252 = scmp.eq.s32.totalorder %s21, 3
      %p253 = por %p251, %p252
      %p254 = scmp.ne.s32.totalorder %s246, %s249
      %p255 = scmp.eq.s32.totalorder %s21, 0
      %p256 = por %p254, %p255
      %p257 = scmp.ne.s32.totalorder %s246, %s249
      %p258 = scmp.eq.s32.totalorder %s26, 3
      %p259 = por %p257, %p258
      %p260 = scmp.ne.s32.totalorder %s249, %s250
      %p261 = scmp.eq.s32.totalorder %s26, 0
      %p262 = por %p260, %p261
      %p263 = scmp.ne.s32.totalorder %s249, %s250
      %p264 = scmp.eq.s32.totalorder %s27, 3
      %p265 = por %p263, %p264
      %p267 = scmp.ne.s32.totalorder %s250, %s266
      %p268 = scmp.eq.s32.totalorder %s27, 0
      %p269 = por %p267, %p268
      %p270 = scmp.le.s32.totalorder 1, %s21
      %p271 = scmp.lt.s32.totalorder %s21, 5
      %p272 = pnand %p270, %p271
      %p273 = pneg %p272
      // Predicated region
      $region9: #{tpu_custom_call.1} parent=5 // pred_check
        _
      $region10: #{tpu_custom_call.1} parent=5 // pred_check_branch
        %275 = sbr.rel (%p272) target = $region12
      $region11: #{tpu_custom_call.1} parent=5 // pred_region
        %s276 = ssub.s32 %s21, 1
        // Predicated region
        $region13: #{tpu_custom_call.1} parent=11 // pred_check
          %p277 = pneg %p150
        $region14: #{tpu_custom_call.1} parent=11 // pred_check_branch
          %279 = sbr.rel (%p277) target = $region16
        $region15: #{tpu_custom_call.1} parent=11 // pred_region
          %s281 = ssub.s32 32, 32
          %282 = vsyncadd [#allocation7], %s281
          %s284 = sshll.u32 [#allocation6], 4
          %s285 = int_to_ptr.vmem [resolvable:$true] %s284
          %287 = dma.hbm_to_vmem [thread:$0]  %s3, 32, %s285, [#allocation7]
        $region16: #{tpu_custom_call.1} parent=11 // pred_fallthru
          _
        // Predicated region
        $region17: #{tpu_custom_call.1} parent=11 // pred_check
          %p288 = pneg %p171
        $region18: #{tpu_custom_call.1} parent=11 // pred_check_branch
          %290 = sbr.rel (%p288) target = $region20
        $region19: #{tpu_custom_call.1} parent=11 // pred_region
          _
        $region20: #{tpu_custom_call.1} parent=11 // pred_fallthru
          _
        // Predicated region
        $region21: #{tpu_custom_call.1} parent=11 // pred_check
          %p291 = pneg %p192
        $region22: #{tpu_custom_call.1} parent=11 // pred_check_branch
          %293 = sbr.rel (%p291) target = $region24
        $region23: #{tpu_custom_call.1} parent=11 // pred_region
          _
        $region24: #{tpu_custom_call.1} parent=11 // pred_fallthru
          _
        // Predicated region
        $region25: #{tpu_custom_call.1} parent=11 // pred_check
          %p294 = pneg %p213
        $region26: #{tpu_custom_call.1} parent=11 // pred_check_branch
          %296 = sbr.rel (%p294) target = $region28
        $region27: #{tpu_custom_call.1} parent=11 // pred_region
          _
        $region28: #{tpu_custom_call.1} parent=11 // pred_fallthru
          _
        // Predicated region
        $region29: #{tpu_custom_call.1} parent=11 // pred_check
          %p297 = pneg %p234
        $region30: #{tpu_custom_call.1} parent=11 // pred_check_branch
          %299 = sbr.rel (%p297) target = $region32
        $region31: #{tpu_custom_call.1} parent=11 // pred_region
          _
        $region32: #{tpu_custom_call.1} parent=11 // pred_fallthru
          _
      $region12: #{tpu_custom_call.1} parent=5 // pred_fallthru
        _
      %p300 = scmp.lt.s32.totalorder %s21, 4
      // Predicated region
      $region33: #{tpu_custom_call.1} parent=5 // pred_check
        %p301 = pneg %p300
      $region34: #{tpu_custom_call.1} parent=5 // pred_check_branch
        %303 = sbr.rel (%p301) target = $region36
      $region35: #{tpu_custom_call.1} parent=5 // pred_region
        // Predicated region
        $region37: #{tpu_custom_call.1} parent=35 // pred_check
          %p304 = pneg %p55
        $region38: #{tpu_custom_call.1} parent=35 // pred_check_branch
          %306 = sbr.rel (%p304) target = $region40
        $region39: #{tpu_custom_call.1} parent=35 // pred_region
          %p307 = scmp.lt.s32.totalorder %s28, 1
          %s308 = scalar_select %p307, %s28, 1
          %p309 = scmp.lt.s32.totalorder %s29, 1
          %s310 = scalar_select %p309, %s29, 1
          %s311 = smul.addr %s308, 2
          %s312 = sadd.s32 %s310, %s311
          %s313 = smul.addr %s312, 2
          %s314 = scalar_lea.vmem %s0, %s313
        $region40: #{tpu_custom_call.1} parent=35 // pred_fallthru
          _
        // Predicated region
        $region41: #{tpu_custom_call.1} parent=35 // pred_check
          %p315 = pneg %p89
        $region42: #{tpu_custom_call.1} parent=35 // pred_check_branch
          %317 = sbr.rel (%p315) target = $region44
        $region43: #{tpu_custom_call.1} parent=35 // pred_region
          %s318 = sand.u32 %s79, 1
          %s319 = scalar_lea.sflag [#allocation4], %s318
          %s320 = sand.u32 %s79, 1
          %s321 = smul.addr %s320, 2
          %s322 = scalar_lea.vmem [#allocation3], %s321
          %s323 = ssub.s32 %s29, 1
          %p324 = scmp.gt.s32.totalorder %s323, 0
          %s325 = scalar_select %p324, %s323, 0
          %s327 = ssub.s32 32, 32
          %328 = vsyncadd %s319, %s327
          %s329 = smul.addr %s28, 2
          %s330 = sadd.s32 %s325, %s329
          %s331 = smul.addr %s330, 32
          %s332 = scalar_lea.hbm %s1, %s331
          %s334 = sshll.u32 %s322, 4
          %s335 = int_to_ptr.vmem [resolvable:$true] %s334
          %337 = dma.hbm_to_vmem [thread:$0]  %s332, 32, %s335, %s319
        $region44: #{tpu_custom_call.1} parent=35 // pred_fallthru
          _
        // Predicated region
        $region45: #{tpu_custom_call.1} parent=35 // pred_check
          %p338 = pneg %p123
        $region46: #{tpu_custom_call.1} parent=35 // pred_check_branch
          %340 = sbr.rel (%p338) target = $region48
        $region47: #{tpu_custom_call.1} parent=35 // pred_region
          %s341 = sadd.s32 %s29, 1
          %p342 = scmp.lt.s32.totalorder %s341, 1
          %s343 = scalar_select %p342, %s341, 1
          %p344 = scmp.lt.s32.totalorder %s28, 1
          %s345 = scalar_select %p344, %s28, 1
          %p346 = scmp.lt.s32.totalorder %s343, 1
          %s347 = scalar_select %p346, %s343, 1
          %s348 = smul.addr %s345, 2
          %s349 = sadd.s32 %s347, %s348
          %s350 = smul.addr %s349, 2
          %s351 = scalar_lea.vmem %s2, %s350
          %s352 = sadd.s32 %s29, 1
          %p353 = scmp.lt.s32.totalorder %s352, 1
          %s354 = scalar_select %p353, %s352, 1
        $region48: #{tpu_custom_call.1} parent=35 // pred_fallthru
          _
      $region36: #{tpu_custom_call.1} parent=5 // pred_fallthru
        _
      %p355 = scmp.le.s32.totalorder 1, %s21
      %p356 = scmp.lt.s32.totalorder %s21, 5
      %p357 = pnand %p355, %p356
      %p358 = pneg %p357
      // Predicated region
      $region49: #{tpu_custom_call.1} parent=5 // pred_check
        _
      $region50: #{tpu_custom_call.1} parent=5 // pred_check_branch
        %360 = sbr.rel (%p357) target = $region52
      $region51: #{tpu_custom_call.1} parent=5 // pred_region
        %s361 = ssub.s32 %s21, 1
        %s362 = sand.u32 %s82, 1
        %s363 = scalar_lea.sflag [#allocation4], %s362
        %s364 = sand.u32 %s82, 1
        %s365 = smul.addr %s364, 2
        %s366 = scalar_lea.vmem [#allocation3], %s365
        // Predicated region
        $region53: #{tpu_custom_call.1} parent=51 // pred_check
          %p367 = pneg %p95
        $region54: #{tpu_custom_call.1} parent=51 // pred_check_branch
          %369 = sbr.rel (%p367) target = $region56
        $region55: #{tpu_custom_call.1} parent=51 // pred_region
          %370 = dma.done %s363, 32
        $region56: #{tpu_custom_call.1} parent=51 // pred_fallthru
          _
        // Predicated region
        $region57: #{tpu_custom_call.1} parent=51 // pred_check
          %p371 = pneg %p150
        $region58: #{tpu_custom_call.1} parent=51 // pred_check_branch
          %373 = sbr.rel (%p371) target = $region60
        $region59: #{tpu_custom_call.1} parent=51 // pred_region
          %374 = dma.done [#allocation7], 32
        $region60: #{tpu_custom_call.1} parent=51 // pred_fallthru
          _
        %p375 = scmp.lt.s32.totalorder %s30, 1
        %s376 = scalar_select %p375, %s30, 1
        %p377 = scmp.lt.s32.totalorder %s31, 1
        %s378 = scalar_select %p377, %s31, 1
        %s379 = smul.addr %s376, 2
        %s380 = sadd.s32 %s378, %s379
        %s381 = smul.addr %s380, 2
        %s382 = scalar_lea.vmem %s0, %s381
        %p383 = pneg %p61
        %p384 = pneg %p58
        %s385 = sand.u32 %s82, 1
        %s386 = scalar_lea.sflag [#allocation4], %s385
        %s387 = sand.u32 %s82, 1
        %s388 = smul.addr %s387, 2
        %s389 = scalar_lea.vmem [#allocation3], %s388
        %p390 = pneg %p95
        %p391 = pneg %p92
        %s392 = sadd.s32 %s31, 1
        %p393 = scmp.lt.s32.totalorder %s392, 1
        %s394 = scalar_select %p393, %s392, 1
        %p395 = scmp.lt.s32.totalorder %s30, 1
        %s396 = scalar_select %p395, %s30, 1
        %p397 = scmp.lt.s32.totalorder %s394, 1
        %s398 = scalar_select %p397, %s394, 1
        %s399 = smul.addr %s396, 2
        %s400 = sadd.s32 %s398, %s399
        %s401 = smul.addr %s400, 2
        %s402 = scalar_lea.vmem %s2, %s401
        %p403 = pneg %p129
        %p404 = pneg %p126
        %p405 = pneg %p150
        %p406 = pneg %p147
        %p407 = pneg %p171
        %p408 = pneg %p168
        %p409 = pneg %p192
        %p410 = pneg %p189
        %p411 = pneg %p213
        %p412 = pneg %p210
        %p413 = pneg %p234
        %p414 = pneg %p231
        %p415 = pneg %p262
        %p416 = pneg %p259
        %s417 = sand.u32 %s249, 1
        %s418 = scalar_lea.sflag [#allocation5], %s417
        %s419 = sand.u32 %s249, 1
        %s420 = smul.addr %s419, 8
        %s421 = scalar_lea.vmem [#allocation8], %s420
        %p422 = scmp.lt.s32.totalorder %s30, 1
        %s423 = scalar_select %p422, %s30, 1
        %p424 = scmp.lt.s32.totalorder %s31, 1
        %s425 = scalar_select %p424, %s31, 1
        %s426 = smul.addr %s423, 2
        %s427 = sadd.s32 %s425, %s426
        %s428 = smul.addr %s427, 2
        %s429 = scalar_lea.vmem %s0, %s428
        %s430 = ssub.s32 %s31, 1
        %p431 = scmp.gt.s32.totalorder %s430, 0
        %s432 = scalar_select %p431, %s430, 0
        %s433 = sadd.s32 %s31, 1
        %p434 = scmp.lt.s32.totalorder %s433, 1
        %s435 = scalar_select %p434, %s433, 1
        %p436 = scmp.lt.s32.totalorder %s30, 1
        %s437 = scalar_select %p436, %s30, 1
        %p438 = scmp.lt.s32.totalorder %s435, 1
        %s439 = scalar_select %p438, %s435, 1
        %s440 = smul.addr %s437, 2
        %s441 = sadd.s32 %s439, %s440
        %s442 = smul.addr %s441, 2
        %s443 = scalar_lea.vmem %s2, %s442
        %s444 = sadd.s32 %s31, 1
        %p445 = scmp.lt.s32.totalorder %s444, 1
        %s446 = scalar_select %p445, %s444, 1
        %v448 = vld [vmem:[#allocation6] sm:$0x3]
        %v449 = vld [vmem:[%s4] sm:$0xf]
        %v450 = vld [vmem:[%s429] sm:$0x3]
        %452 = vset.pattern.permute.xlu0 0
        %453 = vperm.xlu0 %452, %v449
        %v454 = vpop.permute.xlu0 %453
        %vm456 = vcmask 31744
        %v458 = vsel %vm456, %v448, 0
        %vm460 = vcmask 1041408
        %v462 = vsel %vm460, %v450, 0
        %464 = vmatprep.subr.bf16.mxu0 0
        %465 = vmatpush1.bf16.msra.mxu0 %v462
        %466 = vmatprep.subr.bf16.mxu0 0
        %467 = vmatpush1.bf16.msra.mxu0 0
        %468 = vmatprep.subr.bf16.mxu0 0
        %469 = vmatpush1.bf16.msra.mxu0 0
        %470 = vmatprep.subr.bf16.mxu0 0
        %471 = vmatpush1.bf16.msra.mxu0 0
        %472 = vmatprep.subr.bf16.mxu0 0
        %473 = vmatpush1.bf16.msra.mxu0 0
        %474 = vmatprep.subr.bf16.mxu0 0
        %475 = vmatpush1.bf16.msra.mxu0 0
        %476 = vmatprep.subr.bf16.mxu0 0
        %477 = vmatpush1.bf16.msra.mxu0 0
        %478 = vmatprep.subr.bf16.mxu0 0
        %479 = vmatpush1.bf16.msra.mxu0 0
        %480 = vmatprep.subr.bf16.mxu0 0
        %481 = vmatpush1.bf16.msra.mxu0 0
        %482 = vmatprep.subr.bf16.mxu0 0
        %483 = vmatpush1.bf16.msra.mxu0 0
        %484 = vmatprep.subr.bf16.mxu0 0
        %485 = vmatpush1.bf16.msra.mxu0 0
        %486 = vmatprep.subr.bf16.mxu0 0
        %487 = vmatpush1.bf16.msra.mxu0 0
        %488 = vmatprep.subr.bf16.mxu0 0
        %489 = vmatpush1.bf16.msra.mxu0 0
        %490 = vmatprep.subr.bf16.mxu0 0
        %491 = vmatpush1.bf16.msra.mxu0 0
        %492 = vmatprep.subr.bf16.mxu0 0
        %493 = vmatpush1.bf16.msra.mxu0 0
        %494 = vmatprep.subr.bf16.mxu0 0
        %495 = vmatpush1.bf16.msra.mxu0 0
        %496 = vmatprep.mubr.bf16.mxu0 0
        %497 = vmatmul.mubr.bf16.gmra.mrb[0].mxu0 %v458
        %v498 = vpop.f32.mrb[0].mxu0
        %v499 = vadd.f32 %v454, %v498
        %v500 = vpop.f32.mrb[0].mxu0
        %v501 = vpop.f32.mrb[0].mxu0
        %v502 = vpop.f32.mrb[0].mxu0
        %503 = vdwg.mxu0
        %v504 = vxor.u32 %v499, 2147483648
        %v505 = vmul.f32 %v504, 1.442695
        %v506 = vpow.pop %v505
        %v507 = vadd.f32 %v506, 1.0
        %v508 = vrcp.pop %v507
        %v509 = vmul.f32 1.0, %v508
        %v510 = vmul.f32 %v499, %v509
        %vm511 = vcmask 782064
        %512 = vst.msk [vmem:[#allocation2] sm:$0xf] %vm511, 0.0
        %vm513 = vcmask 273664
        %514 = vst.msk [vmem:[#allocation2 + $0x8] sm:$0xf] %vm513, 0.0
        %515 = vst [vmem:[#allocation2 + $0x4] sm:$0xf] %v510
        %v516 = vld [vmem:[%s366] sm:$0x3]
        %v517 = vld [vmem:[%s443] sm:$0x3]
        %v520 = vunpack.c.l.s4 1983009808
        %v521 = vunpack.c.0.s8 %v520
        %v522 = vlaneseq
        %v523 = vshrl.u32 %v522, 7
        %v524 = vsub.s32 %v521, %v523
        %v525 = vrot.slane %v516, %v524
        %526 = vrot.lane.b32.xlu0 %v525, 32
        %v527 = vpop.permute.xlu0 %526
        %v529 = vsel %vm460, %v527, 0
        %531 = vmatprep.subr.bf16.mxu0 0
        %532 = vmatpush1.bf16.msra.mxu0 %v529
        %533 = vmatprep.subr.bf16.mxu0 0
        %534 = vmatpush1.bf16.msra.mxu0 0
        %535 = vmatprep.subr.bf16.mxu0 0
        %536 = vmatpush1.bf16.msra.mxu0 0
        %537 = vmatprep.subr.bf16.mxu0 0
        %538 = vmatpush1.bf16.msra.mxu0 0
        %539 = vmatprep.subr.bf16.mxu0 0
        %540 = vmatpush1.bf16.msra.mxu0 0
        %541 = vmatprep.subr.bf16.mxu0 0
        %542 = vmatpush1.bf16.msra.mxu0 0
        %543 = vmatprep.subr.bf16.mxu0 0
        %544 = vmatpush1.bf16.msra.mxu0 0
        %545 = vmatprep.subr.bf16.mxu0 0
        %546 = vmatpush1.bf16.msra.mxu0 0
        %547 = vmatprep.subr.bf16.mxu0 0
        %548 = vmatpush1.bf16.msra.mxu0 0
        %549 = vmatprep.subr.bf16.mxu0 0
        %550 = vmatpush1.bf16.msra.mxu0 0
        %551 = vmatprep.subr.bf16.mxu0 0
        %552 = vmatpush1.bf16.msra.mxu0 0
        %553 = vmatprep.subr.bf16.mxu0 0
        %554 = vmatpush1.bf16.msra.mxu0 0
        %555 = vmatprep.subr.bf16.mxu0 0
        %556 = vmatpush1.bf16.msra.mxu0 0
        %557 = vmatprep.subr.bf16.mxu0 0
        %558 = vmatpush1.bf16.msra.mxu0 0
        %559 = vmatprep.subr.bf16.mxu0 0
        %560 = vmatpush1.bf16.msra.mxu0 0
        %561 = vmatprep.subr.bf16.mxu0 0
        %562 = vmatpush1.bf16.msra.mxu0 0
        %563 = vmatprep.mubr.bf16.mxu0 0
        %564 = vmatmul.mubr.bf16.gmra.mrb[0].mxu0 %v458
        %v565 = vpop.f32.mrb[0].mxu0
        %v566 = vadd.f32 %v454, %v565
        %v567 = vpop.f32.mrb[0].mxu0
        %v568 = vpop.f32.mrb[0].mxu0
        %v569 = vpop.f32.mrb[0].mxu0
        %570 = vdwg.mxu0
        %v571 = vxor.u32 %v566, 2147483648
        %v572 = vmul.f32 %v571, 1.442695
        %v573 = vpow.pop %v572
        %v574 = vadd.f32 %v573, 1.0
        %v575 = vrcp.pop %v574
        %v576 = vmul.f32 1.0, %v575
        %v577 = vmul.f32 %v566, %v576
        %579 = vrot.lane.b32.xlu0 %v577, 96
        %v580 = vpop.permute.xlu0 %579
        %vm582 = vcmask 1044224
        %583 = vst.msk [vmem:[#allocation2] sm:$0xf] %vm582, %v580
        %v585 = vsel %vm460, %v517, 0
        %587 = vmatprep.subr.bf16.mxu0 0
        %588 = vmatpush1.bf16.msra.mxu0 %v585
        %589 = vmatprep.subr.bf16.mxu0 0
        %590 = vmatpush1.bf16.msra.mxu0 0
        %591 = vmatprep.subr.bf16.mxu0 0
        %592 = vmatpush1.bf16.msra.mxu0 0
        %593 = vmatprep.subr.bf16.mxu0 0
        %594 = vmatpush1.bf16.msra.mxu0 0
        %595 = vmatprep.subr.bf16.mxu0 0
        %596 = vmatpush1.bf16.msra.mxu0 0
        %597 = vmatprep.subr.bf16.mxu0 0
        %598 = vmatpush1.bf16.msra.mxu0 0
        %599 = vmatprep.subr.bf16.mxu0 0
        %600 = vmatpush1.bf16.msra.mxu0 0
        %601 = vmatprep.subr.bf16.mxu0 0
        %602 = vmatpush1.bf16.msra.mxu0 0
        %603 = vmatprep.subr.bf16.mxu0 0
        %604 = vmatpush1.bf16.msra.mxu0 0
        %605 = vmatprep.subr.bf16.mxu0 0
        %606 = vmatpush1.bf16.msra.mxu0 0
        %607 = vmatprep.subr.bf16.mxu0 0
        %608 = vmatpush1.bf16.msra.mxu0 0
        %609 = vmatprep.subr.bf16.mxu0 0
        %610 = vmatpush1.bf16.msra.mxu0 0
        %611 = vmatprep.subr.bf16.mxu0 0
        %612 = vmatpush1.bf16.msra.mxu0 0
        %613 = vmatprep.subr.bf16.mxu0 0
        %614 = vmatpush1.bf16.msra.mxu0 0
        %615 = vmatprep.subr.bf16.mxu0 0
        %616 = vmatpush1.bf16.msra.mxu0 0
        %617 = vmatprep.subr.bf16.mxu0 0
        %618 = vmatpush1.bf16.msra.mxu0 0
        %619 = vmatprep.mubr.bf16.mxu0 0
        %620 = vmatmul.mubr.bf16.gmra.mrb[0].mxu0 %v458
        %v621 = vpop.f32.mrb[0].mxu0
        %v622 = vadd.f32 %v454, %v621
        %v623 = vpop.f32.mrb[0].mxu0
        %v624 = vpop.f32.mrb[0].mxu0
        %v625 = vpop.f32.mrb[0].mxu0
        %626 = vdwg.mxu0
        %v627 = vxor.u32 %v622, 2147483648
        %v628 = vmul.f32 %v627, 1.442695
        %v629 = vpow.pop %v628
        %v630 = vadd.f32 %v629, 1.0
        %v631 = vrcp.pop %v630
        %v632 = vmul.f32 1.0, %v631
        %v633 = vmul.f32 %v622, %v632
        %vm634 = vcmask 257024
        %635 = vst.msk [vmem:[#allocation2 + $0x8] sm:$0xf] %vm634, %v633
        %p636 = scmp.eq.s32.totalorder %s31, 0
        // Predicated region
        $region61: #{tpu_custom_call.1} parent=51 // pred_check
          %p637 = pneg %p636
        $region62: #{tpu_custom_call.1} parent=51 // pred_check_branch
          %639 = sbr.rel (%p637) target = $region64
        $region63: #{tpu_custom_call.1} parent=51 // pred_region
          %640 = vst.msk [vmem:[#allocation2] sm:$0xf] %vm582, 0.0
        $region64: #{tpu_custom_call.1} parent=51 // pred_fallthru
          _
        %p641 = scmp.eq.s32.totalorder %s31, 1
        // Predicated region
        $region65: #{tpu_custom_call.1} parent=51 // pred_check
          %p642 = pneg %p641
        $region66: #{tpu_custom_call.1} parent=51 // pred_check_branch
          %644 = sbr.rel (%p642) target = $region68
        $region67: #{tpu_custom_call.1} parent=51 // pred_region
          %645 = vst.msk [vmem:[#allocation2 + $0x8] sm:$0xf] %vm634, 0.0
        $region68: #{tpu_custom_call.1} parent=51 // pred_fallthru
          _
        %v646 = vld [vmem:[%s5] sm:$0xf]
        %v647 = vld [vmem:[%s6] sm:$0xf]
        %v648 = vld [vmem:[%s7] sm:$0xf]
        %v649 = vld [vmem:[#allocation2] sm:$0xff]
        %651 = vset.pattern.permute.xlu0 2
        %652 = vperm.xlu0 %651, %v646
        %v653 = vpop.permute.xlu0 %652
        %v656 = vcombine.high %v649, %v649
        %657 = vrot.lane.b32.xlu0 %v649, 32
        %v658 = vpop.permute.xlu0 %657
        %659 = vrot.lane.b32.xlu0 %v656, 32
        %v660 = vpop.permute.xlu0 %659
        %vm661 = vcmask 261120
        %v662 = vsel %vm661, %v658, %v660
        %v664 = vmul.f32 %v653, %v662
        %v665 = vld [vmem:[#allocation2] sm:$0xff]
        %666 = vset.pattern.permute.xlu0 7
        %667 = vperm.xlu0 %666, %v646
        %v668 = vpop.permute.xlu0 %667
        %v671 = vcombine.high %v665, %v665
        %672 = vrot.lane.b32.xlu0 %v665, 16
        %v673 = vpop.permute.xlu0 %672
        %674 = vrot.lane.b32.xlu0 %v671, 16
        %v675 = vpop.permute.xlu0 %674
        %vm676 = vcmask 130048
        %v677 = vsel %vm676, %v673, %v675
        %v679 = vmul.f32 %v668, %v677
        %v680 = vadd.f32 %v664, %v679
        %v681 = vld [vmem:[#allocation2 + $0x4] sm:$0xf]
        %682 = vset.pattern.permute.xlu0 12
        %683 = vperm.xlu0 %682, %v646
        %v684 = vpop.permute.xlu0 %683
        %v686 = vmul.f32 %v684, %v681
        %v687 = vadd.f32 %v680, %v686
        %v688 = vld [vmem:[#allocation2 + $0x4] sm:$0xff]
        %689 = vset.pattern.permute.xlu0 17
        %690 = vperm.xlu0 %689, %v646
        %v691 = vpop.permute.xlu0 %690
        %v694 = vcombine.high %v688, %v688
        %695 = vrot.lane.b32.xlu0 %v688, 112
        %v696 = vpop.permute.xlu0 %695
        %697 = vrot.lane.b32.xlu0 %v694, 112
        %v698 = vpop.permute.xlu0 %697
        %vm699 = vcmask 916480
        %v700 = vsel %vm699, %v696, %v698
        %v702 = vmul.f32 %v691, %v700
        %v703 = vadd.f32 %v687, %v702
        %v704 = vld [vmem:[#allocation2 + $0x4] sm:$0xff]
        %705 = vset.pattern.permute.xlu0 22
        %706 = vperm.xlu0 %705, %v646
        %v707 = vpop.permute.xlu0 %706
        %v710 = vcombine.high %v704, %v704
        %711 = vrot.lane.b32.xlu0 %v704, 96
        %v712 = vpop.permute.xlu0 %711
        %713 = vrot.lane.b32.xlu0 %v710, 96
        %v714 = vpop.permute.xlu0 %713
        %vm715 = vcmask 785408
        %v716 = vsel %vm715, %v712, %v714
        %v718 = vmul.f32 %v707, %v716
        %v719 = vadd.f32 %v703, %v718
        %v720 = vld [vmem:[#allocation2] sm:$0xff]
        %721 = vset.pattern.permute.xlu0 0
        %722 = vperm.xlu0 %721, %v646
        %v723 = vpop.permute.xlu0 %722
        %v726 = vcombine.high %v720, %v720
        %727 = vrot.lane.b32.xlu0 %v720, 34
        %v728 = vpop.permute.xlu0 %727
        %729 = vrot.lane.b32.xlu0 %v726, 34
        %v730 = vpop.permute.xlu0 %729
        %vm731 = vcmask 277504
        %v732 = vsel %vm731, %v728, %v730
        %v734 = vmul.f32 %v723, %v732
        %v735 = vld [vmem:[#allocation2] sm:$0xff]
        %736 = vset.pattern.permute.xlu0 5
        %737 = vperm.xlu0 %736, %v646
        %v738 = vpop.permute.xlu0 %737
        %v741 = vcombine.high %v735, %v735
        %742 = vrot.lane.b32.xlu0 %v735, 18
        %v743 = vpop.permute.xlu0 %742
        %744 = vrot.lane.b32.xlu0 %v741, 18
        %v745 = vpop.permute.xlu0 %744
        %vm746 = vcmask 146432
        %v747 = vsel %vm746, %v743, %v745
        %v749 = vmul.f32 %v738, %v747
        %v750 = vadd.f32 %v734, %v749
        %v751 = vld [vmem:[#allocation2] sm:$0xff]
        %752 = vset.pattern.permute.xlu0 10
        %753 = vperm.xlu0 %752, %v646
        %v754 = vpop.permute.xlu0 %753
        %v757 = vcombine.high %v751, %v751
        %758 = vrot.lane.b32.xlu0 %v751, 2
        %v759 = vpop.permute.xlu0 %758
        %760 = vrot.lane.b32.xlu0 %v757, 2
        %v761 = vpop.permute.xlu0 %760
        %vm762 = vcmask 15360
        %v763 = vsel %vm762, %v759, %v761
        %v765 = vmul.f32 %v754, %v763
        %v766 = vadd.f32 %v750, %v765
        %v767 = vld [vmem:[#allocation2 + $0x4] sm:$0xff]
        %768 = vset.pattern.permute.xlu0 15
        %769 = vperm.xlu0 %768, %v646
        %v770 = vpop.permute.xlu0 %769
        %v773 = vcombine.high %v767, %v767
        %774 = vrot.lane.b32.xlu0 %v767, 114
        %v775 = vpop.permute.xlu0 %774
        %776 = vrot.lane.b32.xlu0 %v773, 114
        %v777 = vpop.permute.xlu0 %776
        %vm778 = vcmask 932864
        %v779 = vsel %vm778, %v775, %v777
        %v781 = vmul.f32 %v770, %v779
        %v782 = vadd.f32 %v766, %v781
        %v783 = vld [vmem:[#allocation2 + $0x4] sm:$0xff]
        %784 = vset.pattern.permute.xlu0 20
        %785 = vperm.xlu0 %784, %v646
        %v786 = vpop.permute.xlu0 %785
        %v789 = vcombine.high %v783, %v783
        %790 = vrot.lane.b32.xlu0 %v783, 98
        %v791 = vpop.permute.xlu0 %790
        %792 = vrot.lane.b32.xlu0 %v789, 98
        %v793 = vpop.permute.xlu0 %792
        %vm794 = vcmask 801792
        %v795 = vsel %vm794, %v791, %v793
        %v797 = vmul.f32 %v786, %v795
        %v798 = vadd.f32 %v782, %v797
        %v799 = vlaneseq
        %v800 = vshrl.u32 %v799, 7
        %v801 = vsub.s32 0, %v800
        %v802 = vrot.slane %v648, %v801
        %v803 = vmul.f32 %v802, %v798
        %v804 = vadd.f32 %v719, %v803
        %v805 = vld [vmem:[#allocation2] sm:$0xff]
        %806 = vset.pattern.permute.xlu0 1
        %807 = vperm.xlu0 %806, %v646
        %v808 = vpop.permute.xlu0 %807
        %v811 = vcombine.high %v805, %v805
        %812 = vrot.lane.b32.xlu0 %v805, 33
        %v813 = vpop.permute.xlu0 %812
        %814 = vrot.lane.b32.xlu0 %v811, 33
        %v815 = vpop.permute.xlu0 %814
        %vm816 = vcmask 269312
        %v817 = vsel %vm816, %v813, %v815
        %v819 = vmul.f32 %v808, %v817
        %v820 = vld [vmem:[#allocation2] sm:$0xff]
        %821 = vset.pattern.permute.xlu0 6
        %822 = vperm.xlu0 %821, %v646
        %v823 = vpop.permute.xlu0 %822
        %v826 = vcombine.high %v820, %v820
        %827 = vrot.lane.b32.xlu0 %v820, 17
        %v828 = vpop.permute.xlu0 %827
        %829 = vrot.lane.b32.xlu0 %v826, 17
        %v830 = vpop.permute.xlu0 %829
        %vm831 = vcmask 138240
        %v832 = vsel %vm831, %v828, %v830
        %v834 = vmul.f32 %v823, %v832
        %v835 = vadd.f32 %v819, %v834
        %v836 = vld [vmem:[#allocation2] sm:$0xff]
        %837 = vset.pattern.permute.xlu0 11
        %838 = vperm.xlu0 %837, %v646
        %v839 = vpop.permute.xlu0 %838
        %v842 = vcombine.high %v836, %v836
        %843 = vrot.lane.b32.xlu0 %v836, 1
        %v844 = vpop.permute.xlu0 %843
        %845 = vrot.lane.b32.xlu0 %v842, 1
        %v846 = vpop.permute.xlu0 %845
        %vm847 = vcmask 7168
        %v848 = vsel %vm847, %v844, %v846
        %v850 = vmul.f32 %v839, %v848
        %v851 = vadd.f32 %v835, %v850
        %v852 = vld [vmem:[#allocation2 + $0x4] sm:$0xff]
        %853 = vset.pattern.permute.xlu0 16
        %854 = vperm.xlu0 %853, %v646
        %v855 = vpop.permute.xlu0 %854
        %v858 = vcombine.high %v852, %v852
        %859 = vrot.lane.b32.xlu0 %v852, 113
        %v860 = vpop.permute.xlu0 %859
        %861 = vrot.lane.b32.xlu0 %v858, 113
        %v862 = vpop.permute.xlu0 %861
        %vm863 = vcmask 924672
        %v864 = vsel %vm863, %v860, %v862
        %v866 = vmul.f32 %v855, %v864
        %v867 = vadd.f32 %v851, %v866
        %v868 = vld [vmem:[#allocation2 + $0x4] sm:$0xff]
        %869 = vset.pattern.permute.xlu0 21
        %870 = vperm.xlu0 %869, %v646
        %v871 = vpop.permute.xlu0 %870
        %v874 = vcombine.high %v868, %v868
        %875 = vrot.lane.b32.xlu0 %v868, 97
        %v876 = vpop.permute.xlu0 %875
        %877 = vrot.lane.b32.xlu0 %v874, 97
        %v878 = vpop.permute.xlu0 %877
        %vm879 = vcmask 793600
        %v880 = vsel %vm879, %v876, %v878
        %v882 = vmul.f32 %v871, %v880
        %v883 = vadd.f32 %v867, %v882
        %v884 = vlaneseq
        %v885 = vshrl.u32 %v884, 7
        %v886 = vsub.s32 1, %v885
        %v887 = vrot.slane %v648, %v886
        %v888 = vmul.f32 %v887, %v883
        %v889 = vadd.f32 %v804, %v888
        %v890 = vld [vmem:[#allocation2] sm:$0xff]
        %891 = vset.pattern.permute.xlu0 3
        %892 = vperm.xlu0 %891, %v646
        %v893 = vpop.permute.xlu0 %892
        %v896 = vcombine.high %v890, %v890
        %897 = vrot.lane.b32.xlu0 %v890, 31
        %v898 = vpop.permute.xlu0 %897
        %899 = vrot.lane.b32.xlu0 %v896, 31
        %v900 = vpop.permute.xlu0 %899
        %vm901 = vcmask 252928
        %v902 = vsel %vm901, %v898, %v900
        %v904 = vmul.f32 %v893, %v902
        %v905 = vld [vmem:[#allocation2] sm:$0xff]
        %906 = vset.pattern.permute.xlu0 8
        %907 = vperm.xlu0 %906, %v646
        %v908 = vpop.permute.xlu0 %907
        %v911 = vcombine.high %v905, %v905
        %912 = vrot.lane.b32.xlu0 %v905, 15
        %v913 = vpop.permute.xlu0 %912
        %914 = vrot.lane.b32.xlu0 %v911, 15
        %v915 = vpop.permute.xlu0 %914
        %vm916 = vcmask 121856
        %v917 = vsel %vm916, %v913, %v915
        %v919 = vmul.f32 %v908, %v917
        %v920 = vadd.f32 %v904, %v919
        %v921 = vld [vmem:[#allocation2 + $0x4] sm:$0xff]
        %922 = vset.pattern.permute.xlu0 13
        %923 = vperm.xlu0 %922, %v646
        %v924 = vpop.permute.xlu0 %923
        %v927 = vcombine.high %v921, %v921
        %928 = vrot.lane.b32.xlu0 %v921, 127
        %v929 = vpop.permute.xlu0 %928
        %930 = vrot.lane.b32.xlu0 %v927, 127
        %v931 = vpop.permute.xlu0 %930
        %vm932 = vcmask 1039360
        %v933 = vsel %vm932, %v929, %v931
        %v935 = vmul.f32 %v924, %v933
        %v936 = vadd.f32 %v920, %v935
        %v937 = vld [vmem:[#allocation2 + $0x4] sm:$0xff]
        %938 = vset.pattern.permute.xlu0 18
        %939 = vperm.xlu0 %938, %v646
        %v940 = vpop.permute.xlu0 %939
        %v943 = vcombine.high %v937, %v937
        %944 = vrot.lane.b32.xlu0 %v937, 111
        %v945 = vpop.permute.xlu0 %944
        %946 = vrot.lane.b32.xlu0 %v943, 111
        %v947 = vpop.permute.xlu0 %946
        %vm948 = vcmask 908288
        %v949 = vsel %vm948, %v945, %v947
        %v951 = vmul.f32 %v940, %v949
        %v952 = vadd.f32 %v936, %v951
        %v953 = vld [vmem:[#allocation2 + $0x4] sm:$0xff]
        %954 = vset.pattern.permute.xlu0 23
        %955 = vperm.xlu0 %954, %v646
        %v956 = vpop.permute.xlu0 %955
        %v959 = vcombine.high %v953, %v953
        %960 = vrot.lane.b32.xlu0 %v953, 95
        %v961 = vpop.permute.xlu0 %960
        %962 = vrot.lane.b32.xlu0 %v959, 95
        %v963 = vpop.permute.xlu0 %962
        %vm964 = vcmask 777216
        %v965 = vsel %vm964, %v961, %v963
        %v967 = vmul.f32 %v956, %v965
        %v968 = vadd.f32 %v952, %v967
        %v969 = vlaneseq
        %v970 = vshrl.u32 %v969, 7
        %v971 = vsub.s32 2, %v970
        %v972 = vrot.slane %v648, %v971
        %v973 = vmul.f32 %v972, %v968
        %v974 = vadd.f32 %v889, %v973
        %v975 = vld [vmem:[#allocation2] sm:$0xff]
        %976 = vset.pattern.permute.xlu0 4
        %977 = vperm.xlu0 %976, %v646
        %v978 = vpop.permute.xlu0 %977
        %v981 = vcombine.high %v975, %v975
        %982 = vrot.lane.b32.xlu0 %v975, 30
        %v983 = vpop.permute.xlu0 %982
        %984 = vrot.lane.b32.xlu0 %v981, 30
        %v985 = vpop.permute.xlu0 %984
        %vm986 = vcmask 244736
        %v987 = vsel %vm986, %v983, %v985
        %v989 = vmul.f32 %v978, %v987
        %v990 = vld [vmem:[#allocation2] sm:$0xff]
        %991 = vset.pattern.permute.xlu0 9
        %992 = vperm.xlu0 %991, %v646
        %v993 = vpop.permute.xlu0 %992
        %v996 = vcombine.high %v990, %v990
        %997 = vrot.lane.b32.xlu0 %v990, 14
        %v998 = vpop.permute.xlu0 %997
        %999 = vrot.lane.b32.xlu0 %v996, 14
        %v1000 = vpop.permute.xlu0 %999
        %vm1001 = vcmask 113664
        %v1002 = vsel %vm1001, %v998, %v1000
        %v1004 = vmul.f32 %v993, %v1002
        %v1005 = vadd.f32 %v989, %v1004
        %v1006 = vld [vmem:[#allocation2 + $0x4] sm:$0xff]
        %1007 = vset.pattern.permute.xlu0 14
        %1008 = vperm.xlu0 %1007, %v646
        %v1009 = vpop.permute.xlu0 %1008
        %v1012 = vcombine.high %v1006, %v1006
        %1013 = vrot.lane.b32.xlu0 %v1006, 126
        %v1014 = vpop.permute.xlu0 %1013
        %1015 = vrot.lane.b32.xlu0 %v1012, 126
        %v1016 = vpop.permute.xlu0 %1015
        %vm1017 = vcmask 1031168
        %v1018 = vsel %vm1017, %v1014, %v1016
        %v1020 = vmul.f32 %v1009, %v1018
        %v1021 = vadd.f32 %v1005, %v1020
        %v1022 = vld [vmem:[#allocation2 + $0x4] sm:$0xff]
        %1023 = vset.pattern.permute.xlu0 19
        %1024 = vperm.xlu0 %1023, %v646
        %v1025 = vpop.permute.xlu0 %1024
        %v1028 = vcombine.high %v1022, %v1022
        %1029 = vrot.lane.b32.xlu0 %v1022, 110
        %v1030 = vpop.permute.xlu0 %1029
        %1031 = vrot.lane.b32.xlu0 %v1028, 110
        %v1032 = vpop.permute.xlu0 %1031
        %vm1033 = vcmask 900096
        %v1034 = vsel %vm1033, %v1030, %v1032
        %v1036 = vmul.f32 %v1025, %v1034
        %v1037 = vadd.f32 %v1021, %v1036
        %v1038 = vld [vmem:[#allocation2 + $0x4] sm:$0xff]
        %1039 = vset.pattern.permute.xlu0 24
        %1040 = vperm.xlu0 %1039, %v646
        %v1041 = vpop.permute.xlu0 %1040
        %v1044 = vcombine.high %v1038, %v1038
        %1045 = vrot.lane.b32.xlu0 %v1038, 94
        %v1046 = vpop.permute.xlu0 %1045
        %1047 = vrot.lane.b32.xlu0 %v1044, 94
        %v1048 = vpop.permute.xlu0 %1047
        %vm1049 = vcmask 769024
        %v1050 = vsel %vm1049, %v1046, %v1048
        %v1052 = vmul.f32 %v1041, %v1050
        %v1053 = vadd.f32 %v1037, %v1052
        %v1054 = vlaneseq
        %v1055 = vshrl.u32 %v1054, 7
        %v1056 = vsub.s32 3, %v1055
        %v1057 = vrot.slane %v648, %v1056
        %v1058 = vmul.f32 %v1057, %v1053
        %v1059 = vadd.f32 %v974, %v1058
        %1061 = vset.pattern.permute.xlu0 0
        %1062 = vperm.xlu0 %1061, %v647
        %v1063 = vpop.permute.xlu0 %1062
        %v1065 = vadd.f32 %v1059, %v1063
        %v1066 = vxor.u32 %v1065, 2147483648
        %v1067 = vmul.f32 %v1066, 1.442695
        %v1068 = vpow.pop %v1067
        %v1069 = vadd.f32 %v1068, 1.0
        %v1070 = vrcp.pop %v1069
        %v1071 = vmul.f32 1.0, %v1070
        %v1072 = vmul.f32 %v1065, %v1071
        %1073 = vst [vmem:[%s421] sm:$0x3] %v510
        %1074 = vst [vmem:[%s421 + $0x2] sm:$0x3] %v1072
        %1075 = vst [vmem:[%s421 + $0x2] sm:$0xc] %v510
        %1076 = vst [vmem:[%s421 + $0x4] sm:$0xc] %v1072
        %s1077 = sand.u32 %s249, 1
        %s1078 = scalar_lea.sflag [#allocation5], %s1077
        %s1079 = sand.u32 %s249, 1
        %s1080 = smul.addr %s1079, 8
        %s1081 = scalar_lea.vmem [#allocation8], %s1080
        // Predicated region
        $region69: #{tpu_custom_call.1} parent=51 // pred_check
          %p1082 = pneg %p259
        $region70: #{tpu_custom_call.1} parent=51 // pred_check_branch
          %1084 = sbr.rel (%p1082) target = $region72
        $region71: #{tpu_custom_call.1} parent=51 // pred_region
          %s1086 = ssub.s32 128, 128
          %1087 = vsyncadd %s1078, %s1086
          %s1088 = smul.addr %s30, 2
          %s1089 = sadd.s32 %s31, %s1088
          %s1090 = smul.addr %s1089, 128
          %s1091 = scalar_lea.hbm %s8, %s1090
          %s1093 = sshll.u32 %s1081, 4
          %s1094 = int_to_ptr.vmem [resolvable:$true] %s1093
          %1096 = dma.vmem_to_hbm [thread:$0]  %s1094, 128, %s1091, %s1078
        $region72: #{tpu_custom_call.1} parent=51 // pred_fallthru
          _
      $region52: #{tpu_custom_call.1} parent=5 // pred_fallthru
        _
      %p1097 = scmp.le.s32.totalorder 2, %s21
      // Predicated region
      $region73: #{tpu_custom_call.1} parent=5 // pred_check
        %p1098 = pneg %p1097
      $region74: #{tpu_custom_call.1} parent=5 // pred_check_branch
        %1100 = sbr.rel (%p1098) target = $region76
      $region75: #{tpu_custom_call.1} parent=5 // pred_region
        %s1101 = ssub.s32 %s21, 2
        // Predicated region
        $region77: #{tpu_custom_call.1} parent=75 // pred_check
          %p1102 = pneg %p265
        $region78: #{tpu_custom_call.1} parent=75 // pred_check_branch
          %1104 = sbr.rel (%p1102) target = $region80
        $region79: #{tpu_custom_call.1} parent=75 // pred_region
          %s1105 = sand.u32 %s250, 1
          %s1106 = scalar_lea.sflag [#allocation5], %s1105
          %s1107 = sand.u32 %s250, 1
          %s1108 = smul.addr %s1107, 8
          %s1109 = scalar_lea.vmem [#allocation8], %s1108
          %1110 = dma.done %s1106, 128
        $region80: #{tpu_custom_call.1} parent=75 // pred_fallthru
          _
      $region76: #{tpu_custom_call.1} parent=5 // pred_fallthru
        _
    $region6: #{tpu_custom_call.1} parent=1 // loop_footer
      %s25 = sadd.s32 1, %s21
    $region7: #{tpu_custom_call.1} parent=1 // loop_footer_branch
      %20 = sbr.rel target = $region3
    $region8: #{tpu_custom_call.1} parent=1 // loop_exit
      _
    %1111 = vsyncpa [#allocation4], 1
    %s1112 = scalar_lea.sflag [#allocation4], 1
    %1113 = vsyncpa %s1112, 1
    %1114 = vsyncpa [#allocation7], 1
    %1115 = vsyncpa [#allocation5], 1
    %s1116 = scalar_lea.sflag [#allocation5], 1
    %1117 = vsyncpa %s1116, 1

</llo_original>
